<compile_context>
chip_gen: v6e
topology: v6e:2x2x1
jax: 0.10.0
libtpu: 0.0.40
codegen_flags: <defaults>
</compile_context>

<pallas_src>
import jax
import jax.numpy as jnp
from jax.experimental import pallas as pl
from jax.experimental.pallas import tpu as pltpu

# Model hyperparameters (consistent with Generator.__init__)
EMBED_DIM   = 32    # embedding_dim
NO_TOKENS   = 64    # num_embeddings (vocab)
NO_LAYERS   = 2
HIDDEN_SIZE = 32
BATCH       = 2
SEQ         = 8
V_PAD       = 128   # logits padded to a full 128-lane vreg; sliced in wrapper

assert EMBED_DIM == HIDDEN_SIZE   # fused layer-1 weight layout assumes D == H
assert NO_LAYERS == 2             # kernel hand-unrolls the 2-layer wavefront


# ------------------------------ fused kernel ---------------------------------
def fused_generator_kernel(ids_ref,                      # (T*B, 1) int32, rows t*B+b
                           emb_ref,                      # (V, D)
                           wih0_ref, whh0_ref, b0_ref,   # (D,4H) (H,4H) (1,4H)
                           w1f_ref, b1_ref,              # (2H,4H) (1,4H)
                           h0_ref, c0_ref,               # (L, B, H) initial state
                           wout_ref, bout_ref,           # (H, V_PAD) (1, V_PAD)
                           logits_ref,                   # (T*B, V_PAD) time-major
                           hcn_ref):                     # (L, B, 2H) = [h | c]
    B, T, H = BATCH, SEQ, HIDDEN_SIZE
    TB = T * B

    # ---- embedding gather as a one-hot MXU matmul (no dynamic loads/concats)
    lane = jax.lax.broadcasted_iota(jnp.int32, (TB, NO_TOKENS), 1)
    onehot = (lane == ids_ref[...]).astype(jnp.float32)              # (TB, V)
    x_all = jnp.dot(onehot, emb_ref[...],
                    preferred_element_type=jnp.float32)              # (TB, D)

    # ---- layer-0 input projection for ALL timesteps, bias folded in
    #      (batched precompute, off the recurrent critical path)
    gx0 = (jnp.dot(x_all, wih0_ref[...], preferred_element_type=jnp.float32)
           + b0_ref[...])                                            # (TB, 4H)

    whh0 = whh0_ref[...]                                  # (H, 4H)  loaded once
    w1f = w1f_ref[...]                                    # (2H, 4H) loaded once
    bias1 = jnp.broadcast_to(b1_ref[...], (B, 4 * H))     # hoisted broadcast

    h0 = h0_ref[0]; c0 = c0_ref[0]
    h1 = h0_ref[1]; c1 = c0_ref[1]

    h1_seq = []
    # Wavefront schedule: iteration t issues layer-0 timestep t and layer-1
    # timestep t-1; the two are independent (layer-1 step t-1 depends only on
    # layer-0 step t-1), exposing two recurrent chains for co-issue.
    for t in range(T + 1):
        h0_prev = h0                          # layer-0 hidden from timestep t-1
        if t < T:
            gates0 = gx0[t * B:(t + 1) * B, :] + jnp.dot(
                h0, whh0, preferred_element_type=jnp.float32)        # (B, 4H)
            sig0 = jax.nn.sigmoid(gates0)     # one full 128-lane EUP push
            tnh0 = jnp.tanh(gates0)           # one full 128-lane EUP push
            c0 = sig0[:, H:2 * H] * c0 + sig0[:, :H] * tnh0[:, 2 * H:3 * H]
            h0 = sig0[:, 3 * H:] * jnp.tanh(c0)
        if t > 0:
            # layer-1 step t-1: single fused matmul over [x1_t | h1_{t-1}]
            x1 = jnp.concatenate([h0_prev, h1], axis=-1)             # (B, 2H)
            gates1 = (jnp.dot(x1, w1f, preferred_element_type=jnp.float32)
                      + bias1)                                       # (B, 4H)
            sig1 = jax.nn.sigmoid(gates1)
            tnh1 = jnp.tanh(gates1)
            c1 = sig1[:, H:2 * H] * c1 + sig1[:, :H] * tnh1[:, 2 * H:3 * H]
            h1 = sig1[:, 3 * H:] * jnp.tanh(c1)
            h1_seq.append(h1)

    # ---- output projection; one lane-dense (T*B, 128) store, time-major rows
    y_tm = jnp.concatenate(h1_seq, axis=0)                           # (TB, H)
    logits_ref[...] = (jnp.dot(y_tm, wout_ref[...],
                               preferred_element_type=jnp.float32)
                       + bout_ref[...])

    # ---- final states: one 64-lane store per layer ([h | c] concatenated)
    hcn_ref[0] = jnp.concatenate([h0, c0], axis=-1)
    hcn_ref[1] = jnp.concatenate([h1, c1], axis=-1)


# --------------------------- parameter preparation ----------------------------
def prepare_params(params):
    """One-time layout prep: transpose weights, stack layer-1 [Wih; Whh],
    fuse biases, pad the output projection to 128 lanes."""
    (w_ih0, w_hh0, b_ih0, b_hh0) = params["lstm"][0]
    (w_ih1, w_hh1, b_ih1, b_hh1) = params["lstm"][1]
    H = HIDDEN_SIZE
    return {
        "emb":  params["embedding"],                       # (V, D), plain 2-D
        "wih0": w_ih0.T,                                   # (D, 4H)
        "whh0": w_hh0.T,                                   # (H, 4H)
        "b0":   (b_ih0 + b_hh0).reshape(1, 4 * H),
        # layer-1 fused weight: [x1 | h1_prev] @ [Wih1^T ; Whh1^T]
        "w1f":  jnp.concatenate([w_ih1.T, w_hh1.T], axis=0),   # (2H, 4H)
        "b1":   (b_ih1 + b_hh1).reshape(1, 4 * H),
        "wout": jnp.zeros((H, V_PAD), jnp.float32).at[:, :NO_TOKENS].set(
            params["w_out"].T),
        "bout": jnp.zeros((1, V_PAD), jnp.float32).at[:, :NO_TOKENS].set(
            params["b_out"]),
    }


# ----------------------------- Generator forward ------------------------------
def generator_forward(kparams, x_ids, inner_state=None):
    """x_ids: (B, T) int32 token ids. Returns (logits (B,T,V), (h_n, c_n))."""
    B, T = x_ids.shape
    ids_tm = x_ids.astype(jnp.int32).T.reshape(T * B, 1)   # row index = t*B + b

    if inner_state is None:
        h0 = jnp.zeros((NO_LAYERS, B, HIDDEN_SIZE), jnp.float32)
        c0 = jnp.zeros_like(h0)
    else:
        h0, c0 = inner_state

    grid_spec = pltpu.PrefetchScalarGridSpec(
        num_scalar_prefetch=0,
        grid=(1,),                       # single fused invocation
        in_specs=[
            pl.BlockSpec((T * B, 1), lambda i: (0, 0)),
            pl.BlockSpec((NO_TOKENS, EMBED_DIM), lambda i: (0, 0)),
            pl.BlockSpec((EMBED_DIM, 4 * HIDDEN_SIZE), lambda i: (0, 0)),
            pl.BlockSpec((HIDDEN_SIZE, 4 * HIDDEN_SIZE), lambda i: (0, 0)),
            pl.BlockSpec((1, 4 * HIDDEN_SIZE), lambda i: (0, 0)),
            pl.BlockSpec((2 * HIDDEN_SIZE, 4 * HIDDEN_SIZE), lambda i: (0, 0)),
            pl.BlockSpec((1, 4 * HIDDEN_SIZE), lambda i: (0, 0)),
            pl.BlockSpec((NO_LAYERS, B, HIDDEN_SIZE), lambda i: (0, 0, 0)),
            pl.BlockSpec((NO_LAYERS, B, HIDDEN_SIZE), lambda i: (0, 0, 0)),
            pl.BlockSpec((HIDDEN_SIZE, V_PAD), lambda i: (0, 0)),
            pl.BlockSpec((1, V_PAD), lambda i: (0, 0)),
        ],
        out_specs=[
            pl.BlockSpec((T * B, V_PAD), lambda i: (0, 0)),
            pl.BlockSpec((NO_LAYERS, B, 2 * HIDDEN_SIZE), lambda i: (0, 0, 0)),
        ],
        scratch_shapes=[],
    )
    logits_tm, hcn = pl.pallas_call(
        fused_generator_kernel,
        out_shape=(
            jax.ShapeDtypeStruct((T * B, V_PAD), jnp.float32),
            jax.ShapeDtypeStruct((NO_LAYERS, B, 2 * HIDDEN_SIZE), jnp.float32),
        ),
        grid_spec=grid_spec,
        compiler_params=pltpu.CompilerParams(
            dimension_semantics=("arbitrary",)),   # single TC; batch too small
    )(ids_tm, kparams["emb"], kparams["wih0"], kparams["whh0"], kparams["b0"],
      kparams["w1f"], kparams["b1"], h0, c0, kparams["wout"], kparams["bout"])

    # time-major (T,B,V_PAD) -> batch-major (B,T,V); tiny XLA-side transpose
    logits = logits_tm.reshape(T, B, V_PAD).transpose(1, 0, 2)[:, :, :NO_TOKENS]
    h_n = hcn[:, :, :HIDDEN_SIZE]
    c_n = hcn[:, :, HIDDEN_SIZE:]
    return logits, (h_n, c_n)


# ------------------------------ pure-JAX reference ----------------------------
def reference_forward(params, x_ids, inner_state=None):
    B, T = x_ids.shape
    x = jnp.take(params["embedding"], x_ids, axis=0)          # (B, T, D)
    if inner_state is None:
        h0 = jnp.zeros((NO_LAYERS, B, HIDDEN_SIZE), jnp.float32)
        c0 = jnp.zeros_like(h0)
    else:
        h0, c0 = inner_state
    hs, cs = [], []
    for l, (w_ih, w_hh, b_ih, b_hh) in enumerate(params["lstm"]):
        def step(carry, x_t, w_ih=w_ih, w_hh=w_hh, b_ih=b_ih, b_hh=b_hh):
            h, c = carry
            gates = x_t @ w_ih.T + h @ w_hh.T + b_ih + b_hh
            H = HIDDEN_SIZE
            i = jax.nn.sigmoid(gates[:, :H])
            f = jax.nn.sigmoid(gates[:, H:2 * H])
            g = jnp.tanh(gates[:, 2 * H:3 * H])
            o = jax.nn.sigmoid(gates[:, 3 * H:])
            c = f * c + i * g
            h = o * jnp.tanh(c)
            return (h, c), h
        (hN, cN), ys = jax.lax.scan(step, (h0[l], c0[l]),
                                    jnp.transpose(x, (1, 0, 2)))
        x = jnp.transpose(ys, (1, 0, 2))
        hs.append(hN)
        cs.append(cN)
    logits = x @ params["w_out"].T + params["b_out"]
    return logits, (jnp.stack(hs), jnp.stack(cs))


# ------------------------------- parameter init -------------------------------
def init_params(key):
    n_keys = 2 + 4 * NO_LAYERS + 2
    ks = list(jax.random.split(key, n_keys))
    params = {}
    # nn.Embedding default: N(0, 1)
    params["embedding"] = jax.random.normal(ks[0], (NO_TOKENS, EMBED_DIM),
                                            jnp.float32)
    # nn.LSTM / nn.Linear default: U(-1/sqrt(H), 1/sqrt(H))
    k = 1.0 / float(jnp.sqrt(jnp.float32(HIDDEN_SIZE)))
    lstm = []
    idx = 1
    for l in range(NO_LAYERS):
        in_dim = EMBED_DIM if l == 0 else HIDDEN_SIZE
        w_ih = jax.random.uniform(ks[idx], (4 * HIDDEN_SIZE, in_dim),
                                  jnp.float32, -k, k); idx += 1
        w_hh = jax.random.uniform(ks[idx], (4 * HIDDEN_SIZE, HIDDEN_SIZE),
                                  jnp.float32, -k, k); idx += 1
        b_ih = jax.random.uniform(ks[idx], (4 * HIDDEN_SIZE,),
                                  jnp.float32, -k, k); idx += 1
        b_hh = jax.random.uniform(ks[idx], (4 * HIDDEN_SIZE,),
                                  jnp.float32, -k, k); idx += 1
        lstm.append((w_ih, w_hh, b_ih, b_hh))
    params["lstm"] = lstm
    params["w_out"] = jax.random.uniform(ks[idx], (NO_TOKENS, HIDDEN_SIZE),
                                         jnp.float32, -k, k)
    params["b_out"] = jax.random.uniform(ks[idx + 1], (NO_TOKENS,),
                                         jnp.float32, -k, k)
    return params


if __name__ == "__main__":
    key = jax.random.PRNGKey(0)
    kp, kx, kh, kc = jax.random.split(key, 4)
    params = init_params(kp)
    kparams = prepare_params(params)   # one-time kernel-friendly layout prep

    x_ids = jax.random.randint(kx, (BATCH, SEQ), 0, NO_TOKENS, dtype=jnp.int32)

    # Case 1: inner_state=None (fresh state)
    logits, (h_n, c_n) = generator_forward(kparams, x_ids, None)
    jax.block_until_ready((logits, h_n, c_n))
    logits_ref, (h_ref, c_ref) = reference_forward(params, x_ids, None)

    assert logits.shape == (BATCH, SEQ, NO_TOKENS)
    assert h_n.shape == (NO_LAYERS, BATCH, HIDDEN_SIZE)
    assert c_n.shape == (NO_LAYERS, BATCH, HIDDEN_SIZE)
    assert jnp.allclose(logits, logits_ref, atol=1e-4, rtol=1e-4)
    assert jnp.allclose(h_n, h_ref, atol=1e-4, rtol=1e-4)
    assert jnp.allclose(c_n, c_ref, atol=1e-4, rtol=1e-4)

    # Case 2: user-provided inner_state
    h0 = 0.1 * jax.random.normal(kh, (NO_LAYERS, BATCH, HIDDEN_SIZE), jnp.float32)
    c0 = 0.1 * jax.random.normal(kc, (NO_LAYERS, BATCH, HIDDEN_SIZE), jnp.float32)
    logits2, (h2, c2) = generator_forward(kparams, x_ids, (h0, c0))
    jax.block_until_ready((logits2, h2, c2))
    logits2_ref, (h2_ref, c2_ref) = reference_forward(params, x_ids, (h0, c0))
    assert jnp.allclose(logits2, logits2_ref, atol=1e-4, rtol=1e-4)
    assert jnp.allclose(h2, h2_ref, atol=1e-4, rtol=1e-4)
    assert jnp.allclose(c2, c2_ref, atol=1e-4, rtol=1e-4)

    # TODO(synk): real throughput needs packing many sequences per call
    # (fill the sublane dim / MXU rows); when doing so, add a leading
    # 'parallel' grid axis over batch tiles so v7x's second TensorCore is used.
    print("KERNEL_OK")
</pallas_src>

<mosaic_0001>
module attributes {stable_mosaic.version = 11 : i64} {
  func.func @fused_generator_kernel(%arg0: i32, %arg1: memref<16x1xi32, #tpu.memory_space<vmem>>, %arg2: memref<64x32xf32, #tpu.memory_space<vmem>>, %arg3: memref<32x128xf32, #tpu.memory_space<vmem>>, %arg4: memref<32x128xf32, #tpu.memory_space<vmem>>, %arg5: memref<1x128xf32, #tpu.memory_space<vmem>>, %arg6: memref<64x128xf32, #tpu.memory_space<vmem>>, %arg7: memref<1x128xf32, #tpu.memory_space<vmem>>, %arg8: memref<2x2x32xf32, #tpu.memory_space<vmem>>, %arg9: memref<2x2x32xf32, #tpu.memory_space<vmem>>, %arg10: memref<32x128xf32, #tpu.memory_space<vmem>>, %arg11: memref<1x128xf32, #tpu.memory_space<vmem>>, %arg12: memref<16x128xf32, #tpu.memory_space<vmem>>, %arg13: memref<2x2x64xf32, #tpu.memory_space<vmem>>) attributes {dimension_semantics = [#tpu.dimension_semantics<arbitrary>], iteration_bounds = array<i64: 1>, scalar_prefetch = 0 : i64, scratch_operands = 0 : i64, tpu.core_type = #tpu.core_type<tc>, window_params = [{pipeline_mode = #tpu.pipeline_mode<synchronous>, transform_indices = @transform_0, window_bounds = array<i64: 16, 1>}, {pipeline_mode = #tpu.pipeline_mode<synchronous>, transform_indices = @transform_1, window_bounds = array<i64: 64, 32>}, {pipeline_mode = #tpu.pipeline_mode<synchronous>, transform_indices = @transform_2, window_bounds = array<i64: 32, 128>}, {pipeline_mode = #tpu.pipeline_mode<synchronous>, transform_indices = @transform_3, window_bounds = array<i64: 32, 128>}, {pipeline_mode = #tpu.pipeline_mode<synchronous>, transform_indices = @transform_4, window_bounds = array<i64: 1, 128>}, {pipeline_mode = #tpu.pipeline_mode<synchronous>, transform_indices = @transform_5, window_bounds = array<i64: 64, 128>}, {pipeline_mode = #tpu.pipeline_mode<synchronous>, transform_indices = @transform_6, window_bounds = array<i64: 1, 128>}, {pipeline_mode = #tpu.pipeline_mode<synchronous>, transform_indices = @transform_7, window_bounds = array<i64: 2, 2, 32>}, {pipeline_mode = #tpu.pipeline_mode<synchronous>, transform_indices = @transform_8, window_bounds = array<i64: 2, 2, 32>}, {pipeline_mode = #tpu.pipeline_mode<synchronous>, transform_indices = @transform_9, window_bounds = array<i64: 32, 128>}, {pipeline_mode = #tpu.pipeline_mode<synchronous>, transform_indices = @transform_10, window_bounds = array<i64: 1, 128>}, {pipeline_mode = #tpu.pipeline_mode<synchronous>, transform_indices = @transform_11, window_bounds = array<i64: 16, 128>}, {pipeline_mode = #tpu.pipeline_mode<synchronous>, transform_indices = @transform_12, window_bounds = array<i64: 2, 2, 64>}]} {
    %0 = tpu.iota {dimensions = array<i32: 1>} : vector<16x64xi32>
    %c0 = arith.constant 0 : index
    %c0_0 = arith.constant 0 : index
    %1 = vector.load %arg1[%c0, %c0_0] : memref<16x1xi32, #tpu.memory_space<vmem>>, vector<16x1xi32>
    %2 = vector.broadcast %1 : vector<16x1xi32> to vector<16x64xi32>
    %3 = arith.cmpi eq, %0, %2 : vector<16x64xi32>
    %4 = arith.extui %3 : vector<16x64xi1> to vector<16x64xi32>
    %5 = arith.sitofp %4 : vector<16x64xi32> to vector<16x64xf32>
    %c0_1 = arith.constant 0 : index
    %c0_2 = arith.constant 0 : index
    %6 = vector.load %arg2[%c0_1, %c0_2] : memref<64x32xf32, #tpu.memory_space<vmem>>, vector<64x32xf32>
    %cst = arith.constant dense<0.000000e+00> : vector<16x32xf32>
    %7 = tpu.matmul %5, %6, %cst {dimension_numbers = #tpu.dot_dimension_numbers<[1], [0], [0], [1], [0, 0, 1, 1], [], []>} : vector<16x64xf32>, vector<64x32xf32>, vector<16x32xf32> -> vector<16x32xf32>
    %c0_3 = arith.constant 0 : index
    %c0_4 = arith.constant 0 : index
    %8 = vector.load %arg3[%c0_3, %c0_4] : memref<32x128xf32, #tpu.memory_space<vmem>>, vector<32x128xf32>
    %cst_5 = arith.constant dense<0.000000e+00> : vector<16x128xf32>
    %9 = tpu.matmul %7, %8, %cst_5 {dimension_numbers = #tpu.dot_dimension_numbers<[1], [0], [0], [1], [0, 0, 1, 1], [], []>} : vector<16x32xf32>, vector<32x128xf32>, vector<16x128xf32> -> vector<16x128xf32>
    %c0_6 = arith.constant 0 : index
    %c0_7 = arith.constant 0 : index
    %10 = vector.load %arg5[%c0_6, %c0_7] : memref<1x128xf32, #tpu.memory_space<vmem>>, vector<1x128xf32>
    %11 = vector.broadcast %10 : vector<1x128xf32> to vector<16x128xf32>
    %12 = arith.addf %9, %11 : vector<16x128xf32>
    %c0_8 = arith.constant 0 : index
    %c0_9 = arith.constant 0 : index
    %13 = vector.load %arg4[%c0_8, %c0_9] : memref<32x128xf32, #tpu.memory_space<vmem>>, vector<32x128xf32>
    %c0_10 = arith.constant 0 : index
    %c0_11 = arith.constant 0 : index
    %14 = vector.load %arg6[%c0_10, %c0_11] : memref<64x128xf32, #tpu.memory_space<vmem>>, vector<64x128xf32>
    %c0_12 = arith.constant 0 : index
    %c0_13 = arith.constant 0 : index
    %15 = vector.load %arg7[%c0_12, %c0_13] : memref<1x128xf32, #tpu.memory_space<vmem>>, vector<1x128xf32>
    %16 = vector.shape_cast %15 : vector<1x128xf32> to vector<1x128xf32>
    %17 = vector.broadcast %16 : vector<1x128xf32> to vector<2x128xf32>
    %c0_14 = arith.constant 0 : index
    %c0_15 = arith.constant 0 : index
    %c0_16 = arith.constant 0 : index
    %18 = vector.load %arg8[%c0_14, %c0_15, %c0_16] : memref<2x2x32xf32, #tpu.memory_space<vmem>>, vector<1x2x32xf32>
    %19 = vector.shape_cast %18 : vector<1x2x32xf32> to vector<2x32xf32>
    %c0_17 = arith.constant 0 : index
    %c0_18 = arith.constant 0 : index
    %c0_19 = arith.constant 0 : index
    %20 = vector.load %arg9[%c0_17, %c0_18, %c0_19] : memref<2x2x32xf32, #tpu.memory_space<vmem>>, vector<1x2x32xf32>
    %21 = vector.shape_cast %20 : vector<1x2x32xf32> to vector<2x32xf32>
    %c1 = arith.constant 1 : index
    %c0_20 = arith.constant 0 : index
    %c0_21 = arith.constant 0 : index
    %22 = vector.load %arg8[%c1, %c0_20, %c0_21] : memref<2x2x32xf32, #tpu.memory_space<vmem>>, vector<1x2x32xf32>
    %23 = vector.shape_cast %22 : vector<1x2x32xf32> to vector<2x32xf32>
    %c1_22 = arith.constant 1 : index
    %c0_23 = arith.constant 0 : index
    %c0_24 = arith.constant 0 : index
    %24 = vector.load %arg9[%c1_22, %c0_23, %c0_24] : memref<2x2x32xf32, #tpu.memory_space<vmem>>, vector<1x2x32xf32>
    %25 = vector.shape_cast %24 : vector<1x2x32xf32> to vector<2x32xf32>
    %26 = vector.extract_strided_slice %12 {offsets = [0, 0], sizes = [2, 128], strides = [1, 1]} : vector<16x128xf32> to vector<2x128xf32>
    %cst_25 = arith.constant dense<0.000000e+00> : vector<2x128xf32>
    %27 = tpu.matmul %19, %13, %cst_25 {dimension_numbers = #tpu.dot_dimension_numbers<[1], [0], [0], [1], [0, 0, 1, 1], [], []>} : vector<2x32xf32>, vector<32x128xf32>, vector<2x128xf32> -> vector<2x128xf32>
    %28 = arith.addf %26, %27 : vector<2x128xf32>
    %29 = arith.negf %28 : vector<2x128xf32>
    %30 = math.exp %29 : vector<2x128xf32>
    %cst_26 = arith.constant 1.000000e+00 : f32
    %31 = vector.broadcast %cst_26 : f32 to vector<2x128xf32>
    %32 = arith.addf %31, %30 : vector<2x128xf32>
    %33 = arith.divf %31, %32 : vector<2x128xf32>
    %34 = math.tanh %28 : vector<2x128xf32>
    %35 = vector.extract_strided_slice %33 {offsets = [0, 32], sizes = [2, 32], strides = [1, 1]} : vector<2x128xf32> to vector<2x32xf32>
    %36 = arith.mulf %35, %21 : vector<2x32xf32>
    %37 = vector.extract_strided_slice %33 {offsets = [0, 0], sizes = [2, 32], strides = [1, 1]} : vector<2x128xf32> to vector<2x32xf32>
    %38 = vector.extract_strided_slice %34 {offsets = [0, 64], sizes = [2, 32], strides = [1, 1]} : vector<2x128xf32> to vector<2x32xf32>
    %39 = arith.mulf %37, %38 : vector<2x32xf32>
    %40 = arith.addf %36, %39 : vector<2x32xf32>
    %41 = vector.extract_strided_slice %33 {offsets = [0, 96], sizes = [2, 32], strides = [1, 1]} : vector<2x128xf32> to vector<2x32xf32>
    %42 = math.tanh %40 : vector<2x32xf32>
    %43 = arith.mulf %41, %42 : vector<2x32xf32>
    %44 = vector.extract_strided_slice %12 {offsets = [2, 0], sizes = [2, 128], strides = [1, 1]} : vector<16x128xf32> to vector<2x128xf32>
    %cst_27 = arith.constant dense<0.000000e+00> : vector<2x128xf32>
    %45 = tpu.matmul %43, %13, %cst_27 {dimension_numbers = #tpu.dot_dimension_numbers<[1], [0], [0], [1], [0, 0, 1, 1], [], []>} : vector<2x32xf32>, vector<32x128xf32>, vector<2x128xf32> -> vector<2x128xf32>
    %46 = arith.addf %44, %45 : vector<2x128xf32>
    %47 = arith.negf %46 : vector<2x128xf32>
    %48 = math.exp %47 : vector<2x128xf32>
    %cst_28 = arith.constant 1.000000e+00 : f32
    %49 = vector.broadcast %cst_28 : f32 to vector<2x128xf32>
    %50 = arith.addf %49, %48 : vector<2x128xf32>
    %51 = arith.divf %49, %50 : vector<2x128xf32>
    %52 = math.tanh %46 : vector<2x128xf32>
    %53 = vector.extract_strided_slice %51 {offsets = [0, 32], sizes = [2, 32], strides = [1, 1]} : vector<2x128xf32> to vector<2x32xf32>
    %54 = arith.mulf %53, %40 : vector<2x32xf32>
    %55 = vector.extract_strided_slice %51 {offsets = [0, 0], sizes = [2, 32], strides = [1, 1]} : vector<2x128xf32> to vector<2x32xf32>
    %56 = vector.extract_strided_slice %52 {offsets = [0, 64], sizes = [2, 32], strides = [1, 1]} : vector<2x128xf32> to vector<2x32xf32>
    %57 = arith.mulf %55, %56 : vector<2x32xf32>
    %58 = arith.addf %54, %57 : vector<2x32xf32>
    %59 = vector.extract_strided_slice %51 {offsets = [0, 96], sizes = [2, 32], strides = [1, 1]} : vector<2x128xf32> to vector<2x32xf32>
    %60 = math.tanh %58 : vector<2x32xf32>
    %61 = arith.mulf %59, %60 : vector<2x32xf32>
    %62 = tpu.concatenate %43, %23 in 1 : vector<2x32xf32>, vector<2x32xf32> -> vector<2x64xf32>
    %cst_29 = arith.constant dense<0.000000e+00> : vector<2x128xf32>
    %63 = tpu.matmul %62, %14, %cst_29 {dimension_numbers = #tpu.dot_dimension_numbers<[1], [0], [0], [1], [0, 0, 1, 1], [], []>} : vector<2x64xf32>, vector<64x128xf32>, vector<2x128xf32> -> vector<2x128xf32>
    %64 = arith.addf %63, %17 : vector<2x128xf32>
    %65 = arith.negf %64 : vector<2x128xf32>
    %66 = math.exp %65 : vector<2x128xf32>
    %cst_30 = arith.constant 1.000000e+00 : f32
    %67 = vector.broadcast %cst_30 : f32 to vector<2x128xf32>
    %68 = arith.addf %67, %66 : vector<2x128xf32>
    %69 = arith.divf %67, %68 : vector<2x128xf32>
    %70 = math.tanh %64 : vector<2x128xf32>
    %71 = vector.extract_strided_slice %69 {offsets = [0, 32], sizes = [2, 32], strides = [1, 1]} : vector<2x128xf32> to vector<2x32xf32>
    %72 = arith.mulf %71, %25 : vector<2x32xf32>
    %73 = vector.extract_strided_slice %69 {offsets = [0, 0], sizes = [2, 32], strides = [1, 1]} : vector<2x128xf32> to vector<2x32xf32>
    %74 = vector.extract_strided_slice %70 {offsets = [0, 64], sizes = [2, 32], strides = [1, 1]} : vector<2x128xf32> to vector<2x32xf32>
    %75 = arith.mulf %73, %74 : vector<2x32xf32>
    %76 = arith.addf %72, %75 : vector<2x32xf32>
    %77 = vector.extract_strided_slice %69 {offsets = [0, 96], sizes = [2, 32], strides = [1, 1]} : vector<2x128xf32> to vector<2x32xf32>
    %78 = math.tanh %76 : vector<2x32xf32>
    %79 = arith.mulf %77, %78 : vector<2x32xf32>
    %80 = vector.extract_strided_slice %12 {offsets = [4, 0], sizes = [2, 128], strides = [1, 1]} : vector<16x128xf32> to vector<2x128xf32>
    %cst_31 = arith.constant dense<0.000000e+00> : vector<2x128xf32>
    %81 = tpu.matmul %61, %13, %cst_31 {dimension_numbers = #tpu.dot_dimension_numbers<[1], [0], [0], [1], [0, 0, 1, 1], [], []>} : vector<2x32xf32>, vector<32x128xf32>, vector<2x128xf32> -> vector<2x128xf32>
    %82 = arith.addf %80, %81 : vector<2x128xf32>
    %83 = arith.negf %82 : vector<2x128xf32>
    %84 = math.exp %83 : vector<2x128xf32>
    %cst_32 = arith.constant 1.000000e+00 : f32
    %85 = vector.broadcast %cst_32 : f32 to vector<2x128xf32>
    %86 = arith.addf %85, %84 : vector<2x128xf32>
    %87 = arith.divf %85, %86 : vector<2x128xf32>
    %88 = math.tanh %82 : vector<2x128xf32>
    %89 = vector.extract_strided_slice %87 {offsets = [0, 32], sizes = [2, 32], strides = [1, 1]} : vector<2x128xf32> to vector<2x32xf32>
    %90 = arith.mulf %89, %58 : vector<2x32xf32>
    %91 = vector.extract_strided_slice %87 {offsets = [0, 0], sizes = [2, 32], strides = [1, 1]} : vector<2x128xf32> to vector<2x32xf32>
    %92 = vector.extract_strided_slice %88 {offsets = [0, 64], sizes = [2, 32], strides = [1, 1]} : vector<2x128xf32> to vector<2x32xf32>
    %93 = arith.mulf %91, %92 : vector<2x32xf32>
    %94 = arith.addf %90, %93 : vector<2x32xf32>
    %95 = vector.extract_strided_slice %87 {offsets = [0, 96], sizes = [2, 32], strides = [1, 1]} : vector<2x128xf32> to vector<2x32xf32>
    %96 = math.tanh %94 : vector<2x32xf32>
    %97 = arith.mulf %95, %96 : vector<2x32xf32>
    %98 = tpu.concatenate %61, %79 in 1 : vector<2x32xf32>, vector<2x32xf32> -> vector<2x64xf32>
    %cst_33 = arith.constant dense<0.000000e+00> : vector<2x128xf32>
    %99 = tpu.matmul %98, %14, %cst_33 {dimension_numbers = #tpu.dot_dimension_numbers<[1], [0], [0], [1], [0, 0, 1, 1], [], []>} : vector<2x64xf32>, vector<64x128xf32>, vector<2x128xf32> -> vector<2x128xf32>
    %100 = arith.addf %99, %17 : vector<2x128xf32>
    %101 = arith.negf %100 : vector<2x128xf32>
    %102 = math.exp %101 : vector<2x128xf32>
    %cst_34 = arith.constant 1.000000e+00 : f32
    %103 = vector.broadcast %cst_34 : f32 to vector<2x128xf32>
    %104 = arith.addf %103, %102 : vector<2x128xf32>
    %105 = arith.divf %103, %104 : vector<2x128xf32>
    %106 = math.tanh %100 : vector<2x128xf32>
    %107 = vector.extract_strided_slice %105 {offsets = [0, 32], sizes = [2, 32], strides = [1, 1]} : vector<2x128xf32> to vector<2x32xf32>
    %108 = arith.mulf %107, %76 : vector<2x32xf32>
    %109 = vector.extract_strided_slice %105 {offsets = [0, 0], sizes = [2, 32], strides = [1, 1]} : vector<2x128xf32> to vector<2x32xf32>
    %110 = vector.extract_strided_slice %106 {offsets = [0, 64], sizes = [2, 32], strides = [1, 1]} : vector<2x128xf32> to vector<2x32xf32>
    %111 = arith.mulf %109, %110 : vector<2x32xf32>
    %112 = arith.addf %108, %111 : vector<2x32xf32>
    %113 = vector.extract_strided_slice %105 {offsets = [0, 96], sizes = [2, 32], strides = [1, 1]} : vector<2x128xf32> to vector<2x32xf32>
    %114 = math.tanh %112 : vector<2x32xf32>
    %115 = arith.mulf %113, %114 : vector<2x32xf32>
    %116 = vector.extract_strided_slice %12 {offsets = [6, 0], sizes = [2, 128], strides = [1, 1]} : vector<16x128xf32> to vector<2x128xf32>
    %cst_35 = arith.constant dense<0.000000e+00> : vector<2x128xf32>
    %117 = tpu.matmul %97, %13, %cst_35 {dimension_numbers = #tpu.dot_dimension_numbers<[1], [0], [0], [1], [0, 0, 1, 1], [], []>} : vector<2x32xf32>, vector<32x128xf32>, vector<2x128xf32> -> vector<2x128xf32>
    %118 = arith.addf %116, %117 : vector<2x128xf32>
    %119 = arith.negf %118 : vector<2x128xf32>
    %120 = math.exp %119 : vector<2x128xf32>
    %cst_36 = arith.constant 1.000000e+00 : f32
    %121 = vector.broadcast %cst_36 : f32 to vector<2x128xf32>
    %122 = arith.addf %121, %120 : vector<2x128xf32>
    %123 = arith.divf %121, %122 : vector<2x128xf32>
    %124 = math.tanh %118 : vector<2x128xf32>
    %125 = vector.extract_strided_slice %123 {offsets = [0, 32], sizes = [2, 32], strides = [1, 1]} : vector<2x128xf32> to vector<2x32xf32>
    %126 = arith.mulf %125, %94 : vector<2x32xf32>
    %127 = vector.extract_strided_slice %123 {offsets = [0, 0], sizes = [2, 32], strides = [1, 1]} : vector<2x128xf32> to vector<2x32xf32>
    %128 = vector.extract_strided_slice %124 {offsets = [0, 64], sizes = [2, 32], strides = [1, 1]} : vector<2x128xf32> to vector<2x32xf32>
    %129 = arith.mulf %127, %128 : vector<2x32xf32>
    %130 = arith.addf %126, %129 : vector<2x32xf32>
    %131 = vector.extract_strided_slice %123 {offsets = [0, 96], sizes = [2, 32], strides = [1, 1]} : vector<2x128xf32> to vector<2x32xf32>
    %132 = math.tanh %130 : vector<2x32xf32>
    %133 = arith.mulf %131, %132 : vector<2x32xf32>
    %134 = tpu.concatenate %97, %115 in 1 : vector<2x32xf32>, vector<2x32xf32> -> vector<2x64xf32>
    %cst_37 = arith.constant dense<0.000000e+00> : vector<2x128xf32>
    %135 = tpu.matmul %134, %14, %cst_37 {dimension_numbers = #tpu.dot_dimension_numbers<[1], [0], [0], [1], [0, 0, 1, 1], [], []>} : vector<2x64xf32>, vector<64x128xf32>, vector<2x128xf32> -> vector<2x128xf32>
    %136 = arith.addf %135, %17 : vector<2x128xf32>
    %137 = arith.negf %136 : vector<2x128xf32>
    %138 = math.exp %137 : vector<2x128xf32>
    %cst_38 = arith.constant 1.000000e+00 : f32
    %139 = vector.broadcast %cst_38 : f32 to vector<2x128xf32>
    %140 = arith.addf %139, %138 : vector<2x128xf32>
    %141 = arith.divf %139, %140 : vector<2x128xf32>
    %142 = math.tanh %136 : vector<2x128xf32>
    %143 = vector.extract_strided_slice %141 {offsets = [0, 32], sizes = [2, 32], strides = [1, 1]} : vector<2x128xf32> to vector<2x32xf32>
    %144 = arith.mulf %143, %112 : vector<2x32xf32>
    %145 = vector.extract_strided_slice %141 {offsets = [0, 0], sizes = [2, 32], strides = [1, 1]} : vector<2x128xf32> to vector<2x32xf32>
    %146 = vector.extract_strided_slice %142 {offsets = [0, 64], sizes = [2, 32], strides = [1, 1]} : vector<2x128xf32> to vector<2x32xf32>
    %147 = arith.mulf %145, %146 : vector<2x32xf32>
    %148 = arith.addf %144, %147 : vector<2x32xf32>
    %149 = vector.extract_strided_slice %141 {offsets = [0, 96], sizes = [2, 32], strides = [1, 1]} : vector<2x128xf32> to vector<2x32xf32>
    %150 = math.tanh %148 : vector<2x32xf32>
    %151 = arith.mulf %149, %150 : vector<2x32xf32>
    %152 = vector.extract_strided_slice %12 {offsets = [8, 0], sizes = [2, 128], strides = [1, 1]} : vector<16x128xf32> to vector<2x128xf32>
    %cst_39 = arith.constant dense<0.000000e+00> : vector<2x128xf32>
    %153 = tpu.matmul %133, %13, %cst_39 {dimension_numbers = #tpu.dot_dimension_numbers<[1], [0], [0], [1], [0, 0, 1, 1], [], []>} : vector<2x32xf32>, vector<32x128xf32>, vector<2x128xf32> -> vector<2x128xf32>
    %154 = arith.addf %152, %153 : vector<2x128xf32>
    %155 = arith.negf %154 : vector<2x128xf32>
    %156 = math.exp %155 : vector<2x128xf32>
    %cst_40 = arith.constant 1.000000e+00 : f32
    %157 = vector.broadcast %cst_40 : f32 to vector<2x128xf32>
    %158 = arith.addf %157, %156 : vector<2x128xf32>
    %159 = arith.divf %157, %158 : vector<2x128xf32>
    %160 = math.tanh %154 : vector<2x128xf32>
    %161 = vector.extract_strided_slice %159 {offsets = [0, 32], sizes = [2, 32], strides = [1, 1]} : vector<2x128xf32> to vector<2x32xf32>
    %162 = arith.mulf %161, %130 : vector<2x32xf32>
    %163 = vector.extract_strided_slice %159 {offsets = [0, 0], sizes = [2, 32], strides = [1, 1]} : vector<2x128xf32> to vector<2x32xf32>
    %164 = vector.extract_strided_slice %160 {offsets = [0, 64], sizes = [2, 32], strides = [1, 1]} : vector<2x128xf32> to vector<2x32xf32>
    %165 = arith.mulf %163, %164 : vector<2x32xf32>
    %166 = arith.addf %162, %165 : vector<2x32xf32>
    %167 = vector.extract_strided_slice %159 {offsets = [0, 96], sizes = [2, 32], strides = [1, 1]} : vector<2x128xf32> to vector<2x32xf32>
    %168 = math.tanh %166 : vector<2x32xf32>
    %169 = arith.mulf %167, %168 : vector<2x32xf32>
    %170 = tpu.concatenate %133, %151 in 1 : vector<2x32xf32>, vector<2x32xf32> -> vector<2x64xf32>
    %cst_41 = arith.constant dense<0.000000e+00> : vector<2x128xf32>
    %171 = tpu.matmul %170, %14, %cst_41 {dimension_numbers = #tpu.dot_dimension_numbers<[1], [0], [0], [1], [0, 0, 1, 1], [], []>} : vector<2x64xf32>, vector<64x128xf32>, vector<2x128xf32> -> vector<2x128xf32>
    %172 = arith.addf %171, %17 : vector<2x128xf32>
    %173 = arith.negf %172 : vector<2x128xf32>
    %174 = math.exp %173 : vector<2x128xf32>
    %cst_42 = arith.constant 1.000000e+00 : f32
    %175 = vector.broadcast %cst_42 : f32 to vector<2x128xf32>
    %176 = arith.addf %175, %174 : vector<2x128xf32>
    %177 = arith.divf %175, %176 : vector<2x128xf32>
    %178 = math.tanh %172 : vector<2x128xf32>
    %179 = vector.extract_strided_slice %177 {offsets = [0, 32], sizes = [2, 32], strides = [1, 1]} : vector<2x128xf32> to vector<2x32xf32>
    %180 = arith.mulf %179, %148 : vector<2x32xf32>
    %181 = vector.extract_strided_slice %177 {offsets = [0, 0], sizes = [2, 32], strides = [1, 1]} : vector<2x128xf32> to vector<2x32xf32>
    %182 = vector.extract_strided_slice %178 {offsets = [0, 64], sizes = [2, 32], strides = [1, 1]} : vector<2x128xf32> to vector<2x32xf32>
    %183 = arith.mulf %181, %182 : vector<2x32xf32>
    %184 = arith.addf %180, %183 : vector<2x32xf32>
    %185 = vector.extract_strided_slice %177 {offsets = [0, 96], sizes = [2, 32], strides = [1, 1]} : vector<2x128xf32> to vector<2x32xf32>
    %186 = math.tanh %184 : vector<2x32xf32>
    %187 = arith.mulf %185, %186 : vector<2x32xf32>
    %188 = vector.extract_strided_slice %12 {offsets = [10, 0], sizes = [2, 128], strides = [1, 1]} : vector<16x128xf32> to vector<2x128xf32>
    %cst_43 = arith.constant dense<0.000000e+00> : vector<2x128xf32>
    %189 = tpu.matmul %169, %13, %cst_43 {dimension_numbers = #tpu.dot_dimension_numbers<[1], [0], [0], [1], [0, 0, 1, 1], [], []>} : vector<2x32xf32>, vector<32x128xf32>, vector<2x128xf32> -> vector<2x128xf32>
    %190 = arith.addf %188, %189 : vector<2x128xf32>
    %191 = arith.negf %190 : vector<2x128xf32>
    %192 = math.exp %191 : vector<2x128xf32>
    %cst_44 = arith.constant 1.000000e+00 : f32
    %193 = vector.broadcast %cst_44 : f32 to vector<2x128xf32>
    %194 = arith.addf %193, %192 : vector<2x128xf32>
    %195 = arith.divf %193, %194 : vector<2x128xf32>
    %196 = math.tanh %190 : vector<2x128xf32>
    %197 = vector.extract_strided_slice %195 {offsets = [0, 32], sizes = [2, 32], strides = [1, 1]} : vector<2x128xf32> to vector<2x32xf32>
    %198 = arith.mulf %197, %166 : vector<2x32xf32>
    %199 = vector.extract_strided_slice %195 {offsets = [0, 0], sizes = [2, 32], strides = [1, 1]} : vector<2x128xf32> to vector<2x32xf32>
    %200 = vector.extract_strided_slice %196 {offsets = [0, 64], sizes = [2, 32], strides = [1, 1]} : vector<2x128xf32> to vector<2x32xf32>
    %201 = arith.mulf %199, %200 : vector<2x32xf32>
    %202 = arith.addf %198, %201 : vector<2x32xf32>
    %203 = vector.extract_strided_slice %195 {offsets = [0, 96], sizes = [2, 32], strides = [1, 1]} : vector<2x128xf32> to vector<2x32xf32>
    %204 = math.tanh %202 : vector<2x32xf32>
    %205 = arith.mulf %203, %204 : vector<2x32xf32>
    %206 = tpu.concatenate %169, %187 in 1 : vector<2x32xf32>, vector<2x32xf32> -> vector<2x64xf32>
    %cst_45 = arith.constant dense<0.000000e+00> : vector<2x128xf32>
    %207 = tpu.matmul %206, %14, %cst_45 {dimension_numbers = #tpu.dot_dimension_numbers<[1], [0], [0], [1], [0, 0, 1, 1], [], []>} : vector<2x64xf32>, vector<64x128xf32>, vector<2x128xf32> -> vector<2x128xf32>
    %208 = arith.addf %207, %17 : vector<2x128xf32>
    %209 = arith.negf %208 : vector<2x128xf32>
    %210 = math.exp %209 : vector<2x128xf32>
    %cst_46 = arith.constant 1.000000e+00 : f32
    %211 = vector.broadcast %cst_46 : f32 to vector<2x128xf32>
    %212 = arith.addf %211, %210 : vector<2x128xf32>
    %213 = arith.divf %211, %212 : vector<2x128xf32>
    %214 = math.tanh %208 : vector<2x128xf32>
    %215 = vector.extract_strided_slice %213 {offsets = [0, 32], sizes = [2, 32], strides = [1, 1]} : vector<2x128xf32> to vector<2x32xf32>
    %216 = arith.mulf %215, %184 : vector<2x32xf32>
    %217 = vector.extract_strided_slice %213 {offsets = [0, 0], sizes = [2, 32], strides = [1, 1]} : vector<2x128xf32> to vector<2x32xf32>
    %218 = vector.extract_strided_slice %214 {offsets = [0, 64], sizes = [2, 32], strides = [1, 1]} : vector<2x128xf32> to vector<2x32xf32>
    %219 = arith.mulf %217, %218 : vector<2x32xf32>
    %220 = arith.addf %216, %219 : vector<2x32xf32>
    %221 = vector.extract_strided_slice %213 {offsets = [0, 96], sizes = [2, 32], strides = [1, 1]} : vector<2x128xf32> to vector<2x32xf32>
    %222 = math.tanh %220 : vector<2x32xf32>
    %223 = arith.mulf %221, %222 : vector<2x32xf32>
    %224 = vector.extract_strided_slice %12 {offsets = [12, 0], sizes = [2, 128], strides = [1, 1]} : vector<16x128xf32> to vector<2x128xf32>
    %cst_47 = arith.constant dense<0.000000e+00> : vector<2x128xf32>
    %225 = tpu.matmul %205, %13, %cst_47 {dimension_numbers = #tpu.dot_dimension_numbers<[1], [0], [0], [1], [0, 0, 1, 1], [], []>} : vector<2x32xf32>, vector<32x128xf32>, vector<2x128xf32> -> vector<2x128xf32>
    %226 = arith.addf %224, %225 : vector<2x128xf32>
    %227 = arith.negf %226 : vector<2x128xf32>
    %228 = math.exp %227 : vector<2x128xf32>
    %cst_48 = arith.constant 1.000000e+00 : f32
    %229 = vector.broadcast %cst_48 : f32 to vector<2x128xf32>
    %230 = arith.addf %229, %228 : vector<2x128xf32>
    %231 = arith.divf %229, %230 : vector<2x128xf32>
    %232 = math.tanh %226 : vector<2x128xf32>
    %233 = vector.extract_strided_slice %231 {offsets = [0, 32], sizes = [2, 32], strides = [1, 1]} : vector<2x128xf32> to vector<2x32xf32>
    %234 = arith.mulf %233, %202 : vector<2x32xf32>
    %235 = vector.extract_strided_slice %231 {offsets = [0, 0], sizes = [2, 32], strides = [1, 1]} : vector<2x128xf32> to vector<2x32xf32>
    %236 = vector.extract_strided_slice %232 {offsets = [0, 64], sizes = [2, 32], strides = [1, 1]} : vector<2x128xf32> to vector<2x32xf32>
    %237 = arith.mulf %235, %236 : vector<2x32xf32>
    %238 = arith.addf %234, %237 : vector<2x32xf32>
    %239 = vector.extract_strided_slice %231 {offsets = [0, 96], sizes = [2, 32], strides = [1, 1]} : vector<2x128xf32> to vector<2x32xf32>
    %240 = math.tanh %238 : vector<2x32xf32>
    %241 = arith.mulf %239, %240 : vector<2x32xf32>
    %242 = tpu.concatenate %205, %223 in 1 : vector<2x32xf32>, vector<2x32xf32> -> vector<2x64xf32>
    %cst_49 = arith.constant dense<0.000000e+00> : vector<2x128xf32>
    %243 = tpu.matmul %242, %14, %cst_49 {dimension_numbers = #tpu.dot_dimension_numbers<[1], [0], [0], [1], [0, 0, 1, 1], [], []>} : vector<2x64xf32>, vector<64x128xf32>, vector<2x128xf32> -> vector<2x128xf32>
    %244 = arith.addf %243, %17 : vector<2x128xf32>
    %245 = arith.negf %244 : vector<2x128xf32>
    %246 = math.exp %245 : vector<2x128xf32>
    %cst_50 = arith.constant 1.000000e+00 : f32
    %247 = vector.broadcast %cst_50 : f32 to vector<2x128xf32>
    %248 = arith.addf %247, %246 : vector<2x128xf32>
    %249 = arith.divf %247, %248 : vector<2x128xf32>
    %250 = math.tanh %244 : vector<2x128xf32>
    %251 = vector.extract_strided_slice %249 {offsets = [0, 32], sizes = [2, 32], strides = [1, 1]} : vector<2x128xf32> to vector<2x32xf32>
    %252 = arith.mulf %251, %220 : vector<2x32xf32>
    %253 = vector.extract_strided_slice %249 {offsets = [0, 0], sizes = [2, 32], strides = [1, 1]} : vector<2x128xf32> to vector<2x32xf32>
    %254 = vector.extract_strided_slice %250 {offsets = [0, 64], sizes = [2, 32], strides = [1, 1]} : vector<2x128xf32> to vector<2x32xf32>
    %255 = arith.mulf %253, %254 : vector<2x32xf32>
    %256 = arith.addf %252, %255 : vector<2x32xf32>
    %257 = vector.extract_strided_slice %249 {offsets = [0, 96], sizes = [2, 32], strides = [1, 1]} : vector<2x128xf32> to vector<2x32xf32>
    %258 = math.tanh %256 : vector<2x32xf32>
    %259 = arith.mulf %257, %258 : vector<2x32xf32>
    %260 = vector.extract_strided_slice %12 {offsets = [14, 0], sizes = [2, 128], strides = [1, 1]} : vector<16x128xf32> to vector<2x128xf32>
    %cst_51 = arith.constant dense<0.000000e+00> : vector<2x128xf32>
    %261 = tpu.matmul %241, %13, %cst_51 {dimension_numbers = #tpu.dot_dimension_numbers<[1], [0], [0], [1], [0, 0, 1, 1], [], []>} : vector<2x32xf32>, vector<32x128xf32>, vector<2x128xf32> -> vector<2x128xf32>
    %262 = arith.addf %260, %261 : vector<2x128xf32>
    %263 = arith.negf %262 : vector<2x128xf32>
    %264 = math.exp %263 : vector<2x128xf32>
    %cst_52 = arith.constant 1.000000e+00 : f32
    %265 = vector.broadcast %cst_52 : f32 to vector<2x128xf32>
    %266 = arith.addf %265, %264 : vector<2x128xf32>
    %267 = arith.divf %265, %266 : vector<2x128xf32>
    %268 = math.tanh %262 : vector<2x128xf32>
    %269 = vector.extract_strided_slice %267 {offsets = [0, 32], sizes = [2, 32], strides = [1, 1]} : vector<2x128xf32> to vector<2x32xf32>
    %270 = arith.mulf %269, %238 : vector<2x32xf32>
    %271 = vector.extract_strided_slice %267 {offsets = [0, 0], sizes = [2, 32], strides = [1, 1]} : vector<2x128xf32> to vector<2x32xf32>
    %272 = vector.extract_strided_slice %268 {offsets = [0, 64], sizes = [2, 32], strides = [1, 1]} : vector<2x128xf32> to vector<2x32xf32>
    %273 = arith.mulf %271, %272 : vector<2x32xf32>
    %274 = arith.addf %270, %273 : vector<2x32xf32>
    %275 = vector.extract_strided_slice %267 {offsets = [0, 96], sizes = [2, 32], strides = [1, 1]} : vector<2x128xf32> to vector<2x32xf32>
    %276 = math.tanh %274 : vector<2x32xf32>
    %277 = arith.mulf %275, %276 : vector<2x32xf32>
    %278 = tpu.concatenate %241, %259 in 1 : vector<2x32xf32>, vector<2x32xf32> -> vector<2x64xf32>
    %cst_53 = arith.constant dense<0.000000e+00> : vector<2x128xf32>
    %279 = tpu.matmul %278, %14, %cst_53 {dimension_numbers = #tpu.dot_dimension_numbers<[1], [0], [0], [1], [0, 0, 1, 1], [], []>} : vector<2x64xf32>, vector<64x128xf32>, vector<2x128xf32> -> vector<2x128xf32>
    %280 = arith.addf %279, %17 : vector<2x128xf32>
    %281 = arith.negf %280 : vector<2x128xf32>
    %282 = math.exp %281 : vector<2x128xf32>
    %cst_54 = arith.constant 1.000000e+00 : f32
    %283 = vector.broadcast %cst_54 : f32 to vector<2x128xf32>
    %284 = arith.addf %283, %282 : vector<2x128xf32>
    %285 = arith.divf %283, %284 : vector<2x128xf32>
    %286 = math.tanh %280 : vector<2x128xf32>
    %287 = vector.extract_strided_slice %285 {offsets = [0, 32], sizes = [2, 32], strides = [1, 1]} : vector<2x128xf32> to vector<2x32xf32>
    %288 = arith.mulf %287, %256 : vector<2x32xf32>
    %289 = vector.extract_strided_slice %285 {offsets = [0, 0], sizes = [2, 32], strides = [1, 1]} : vector<2x128xf32> to vector<2x32xf32>
    %290 = vector.extract_strided_slice %286 {offsets = [0, 64], sizes = [2, 32], strides = [1, 1]} : vector<2x128xf32> to vector<2x32xf32>
    %291 = arith.mulf %289, %290 : vector<2x32xf32>
    %292 = arith.addf %288, %291 : vector<2x32xf32>
    %293 = vector.extract_strided_slice %285 {offsets = [0, 96], sizes = [2, 32], strides = [1, 1]} : vector<2x128xf32> to vector<2x32xf32>
    %294 = math.tanh %292 : vector<2x32xf32>
    %295 = arith.mulf %293, %294 : vector<2x32xf32>
    %296 = tpu.concatenate %277, %295 in 1 : vector<2x32xf32>, vector<2x32xf32> -> vector<2x64xf32>
    %cst_55 = arith.constant dense<0.000000e+00> : vector<2x128xf32>
    %297 = tpu.matmul %296, %14, %cst_55 {dimension_numbers = #tpu.dot_dimension_numbers<[1], [0], [0], [1], [0, 0, 1, 1], [], []>} : vector<2x64xf32>, vector<64x128xf32>, vector<2x128xf32> -> vector<2x128xf32>
    %298 = arith.addf %297, %17 : vector<2x128xf32>
    %299 = arith.negf %298 : vector<2x128xf32>
    %300 = math.exp %299 : vector<2x128xf32>
    %cst_56 = arith.constant 1.000000e+00 : f32
    %301 = vector.broadcast %cst_56 : f32 to vector<2x128xf32>
    %302 = arith.addf %301, %300 : vector<2x128xf32>
    %303 = arith.divf %301, %302 : vector<2x128xf32>
    %304 = math.tanh %298 : vector<2x128xf32>
    %305 = vector.extract_strided_slice %303 {offsets = [0, 32], sizes = [2, 32], strides = [1, 1]} : vector<2x128xf32> to vector<2x32xf32>
    %306 = arith.mulf %305, %292 : vector<2x32xf32>
    %307 = vector.extract_strided_slice %303 {offsets = [0, 0], sizes = [2, 32], strides = [1, 1]} : vector<2x128xf32> to vector<2x32xf32>
    %308 = vector.extract_strided_slice %304 {offsets = [0, 64], sizes = [2, 32], strides = [1, 1]} : vector<2x128xf32> to vector<2x32xf32>
    %309 = arith.mulf %307, %308 : vector<2x32xf32>
    %310 = arith.addf %306, %309 : vector<2x32xf32>
    %311 = vector.extract_strided_slice %303 {offsets = [0, 96], sizes = [2, 32], strides = [1, 1]} : vector<2x128xf32> to vector<2x32xf32>
    %312 = math.tanh %310 : vector<2x32xf32>
    %313 = arith.mulf %311, %312 : vector<2x32xf32>
    %314 = tpu.concatenate %79, %115, %151, %187, %223, %259, %295, %313 in 0 : vector<2x32xf32>, vector<2x32xf32>, vector<2x32xf32>, vector<2x32xf32>, vector<2x32xf32>, vector<2x32xf32>, vector<2x32xf32>, vector<2x32xf32> -> vector<16x32xf32>
    %c0_57 = arith.constant 0 : index
    %c0_58 = arith.constant 0 : index
    %315 = vector.load %arg10[%c0_57, %c0_58] : memref<32x128xf32, #tpu.memory_space<vmem>>, vector<32x128xf32>
    %cst_59 = arith.constant dense<0.000000e+00> : vector<16x128xf32>
    %316 = tpu.matmul %314, %315, %cst_59 {dimension_numbers = #tpu.dot_dimension_numbers<[1], [0], [0], [1], [0, 0, 1, 1], [], []>} : vector<16x32xf32>, vector<32x128xf32>, vector<16x128xf32> -> vector<16x128xf32>
    %c0_60 = arith.constant 0 : index
    %c0_61 = arith.constant 0 : index
    %317 = vector.load %arg11[%c0_60, %c0_61] : memref<1x128xf32, #tpu.memory_space<vmem>>, vector<1x128xf32>
    %318 = vector.broadcast %317 : vector<1x128xf32> to vector<16x128xf32>
    %319 = arith.addf %316, %318 : vector<16x128xf32>
    %c0_62 = arith.constant 0 : index
    %c0_63 = arith.constant 0 : index
    %320 = vector.load %arg12[%c0_62, %c0_63] : memref<16x128xf32, #tpu.memory_space<vmem>>, vector<16x128xf32>
    tpu.vector_store %arg12[%c0_62, %c0_63], %319 {strides = array<i32>} : memref<16x128xf32, #tpu.memory_space<vmem>>, vector<16x128xf32>,
    %321 = tpu.concatenate %277, %274 in 1 : vector<2x32xf32>, vector<2x32xf32> -> vector<2x64xf32>
    %c0_64 = arith.constant 0 : index
    %c0_65 = arith.constant 0 : index
    %c0_66 = arith.constant 0 : index
    %322 = vector.load %arg13[%c0_64, %c0_65, %c0_66] : memref<2x2x64xf32, #tpu.memory_space<vmem>>, vector<1x2x64xf32>
    %323 = vector.shape_cast %322 : vector<1x2x64xf32> to vector<2x64xf32>
    %324 = vector.shape_cast %321 : vector<2x64xf32> to vector<1x2x64xf32>
    tpu.vector_store %arg13[%c0_64, %c0_65, %c0_66], %324 {strides = array<i32>} : memref<2x2x64xf32, #tpu.memory_space<vmem>>, vector<1x2x64xf32>,
    %325 = tpu.concatenate %313, %310 in 1 : vector<2x32xf32>, vector<2x32xf32> -> vector<2x64xf32>
    %c1_67 = arith.constant 1 : index
    %c0_68 = arith.constant 0 : index
    %c0_69 = arith.constant 0 : index
    %326 = vector.load %arg13[%c1_67, %c0_68, %c0_69] : memref<2x2x64xf32, #tpu.memory_space<vmem>>, vector<1x2x64xf32>
    %327 = vector.shape_cast %326 : vector<1x2x64xf32> to vector<2x64xf32>
    %328 = vector.shape_cast %325 : vector<2x64xf32> to vector<1x2x64xf32>
    tpu.vector_store %arg13[%c1_67, %c0_68, %c0_69], %328 {strides = array<i32>} : memref<2x2x64xf32, #tpu.memory_space<vmem>>, vector<1x2x64xf32>,
    return
  }
  func.func @transform_0(%arg0: i32) -> (i32, i32) {
    %c0_i32 = arith.constant 0 : i32
    %c0_i32_0 = arith.constant 0 : i32
    %c0_i32_1 = arith.constant 0 : i32
    return %c0_i32, %c0_i32_0 : i32, i32
  }
  func.func @transform_1(%arg0: i32) -> (i32, i32) {
    %c0_i32 = arith.constant 0 : i32
    %c0_i32_0 = arith.constant 0 : i32
    %c0_i32_1 = arith.constant 0 : i32
    return %c0_i32, %c0_i32_0 : i32, i32
  }
  func.func @transform_2(%arg0: i32) -> (i32, i32) {
    %c0_i32 = arith.constant 0 : i32
    %c0_i32_0 = arith.constant 0 : i32
    %c0_i32_1 = arith.constant 0 : i32
    return %c0_i32, %c0_i32_0 : i32, i32
  }
  func.func @transform_3(%arg0: i32) -> (i32, i32) {
    %c0_i32 = arith.constant 0 : i32
    %c0_i32_0 = arith.constant 0 : i32
    %c0_i32_1 = arith.constant 0 : i32
    return %c0_i32, %c0_i32_0 : i32, i32
  }
  func.func @transform_4(%arg0: i32) -> (i32, i32) {
    %c0_i32 = arith.constant 0 : i32
    %c0_i32_0 = arith.constant 0 : i32
    %c0_i32_1 = arith.constant 0 : i32
    return %c0_i32, %c0_i32_0 : i32, i32
  }
  func.func @transform_5(%arg0: i32) -> (i32, i32) {
    %c0_i32 = arith.constant 0 : i32
    %c0_i32_0 = arith.constant 0 : i32
    %c0_i32_1 = arith.constant 0 : i32
    return %c0_i32, %c0_i32_0 : i32, i32
  }
  func.func @transform_6(%arg0: i32) -> (i32, i32) {
    %c0_i32 = arith.constant 0 : i32
    %c0_i32_0 = arith.constant 0 : i32
    %c0_i32_1 = arith.constant 0 : i32
    return %c0_i32, %c0_i32_0 : i32, i32
  }
  func.func @transform_7(%arg0: i32) -> (i32, i32, i32) {
    %c0_i32 = arith.constant 0 : i32
    %c0_i32_0 = arith.constant 0 : i32
    %c0_i32_1 = arith.constant 0 : i32
    %c0_i32_2 = arith.constant 0 : i32
    return %c0_i32, %c0_i32_0, %c0_i32_1 : i32, i32, i32
  }
  func.func @transform_8(%arg0: i32) -> (i32, i32, i32) {
    %c0_i32 = arith.constant 0 : i32
    %c0_i32_0 = arith.constant 0 : i32
    %c0_i32_1 = arith.constant 0 : i32
    %c0_i32_2 = arith.constant 0 : i32
    return %c0_i32, %c0_i32_0, %c0_i32_1 : i32, i32, i32
  }
  func.func @transform_9(%arg0: i32) -> (i32, i32) {
    %c0_i32 = arith.constant 0 : i32
    %c0_i32_0 = arith.constant 0 : i32
    %c0_i32_1 = arith.constant 0 : i32
    return %c0_i32, %c0_i32_0 : i32, i32
  }
  func.func @transform_10(%arg0: i32) -> (i32, i32) {
    %c0_i32 = arith.constant 0 : i32
    %c0_i32_0 = arith.constant 0 : i32
    %c0_i32_1 = arith.constant 0 : i32
    return %c0_i32, %c0_i32_0 : i32, i32
  }
  func.func @transform_11(%arg0: i32) -> (i32, i32) {
    %c0_i32 = arith.constant 0 : i32
    %c0_i32_0 = arith.constant 0 : i32
    %c0_i32_1 = arith.constant 0 : i32
    return %c0_i32, %c0_i32_0 : i32, i32
  }
  func.func @transform_12(%arg0: i32) -> (i32, i32, i32) {
    %c0_i32 = arith.constant 0 : i32
    %c0_i32_0 = arith.constant 0 : i32
    %c0_i32_1 = arith.constant 0 : i32
    %c0_i32_2 = arith.constant 0 : i32
    return %c0_i32, %c0_i32_0, %c0_i32_1 : i32, i32, i32
  }
}

</mosaic_0001>

<llo_original>
// kernel: tpu_custom_call.1
$region0: #{tpu_custom_call.1}
  #allocation0 [shape = 'u32[]', space=smem, size = 0x4, offset = 0x4, fixed_abs, tag = 'smem constant byte address 0x4 - core index']
  #allocation1 [shape = 'u32[144,128]{1,0:T(1,128)}', space=vmem, size = 0x12000, scoped, tag = 'internal scratch']
  %s0 = inlined_call_operand.vmem [shape: s32[16,1], index: 0, kind: input, shape index: {}]
  %s1 = inlined_call_operand.vmem [shape: f32[64,32], index: 1, kind: input, shape index: {}]
  %s2 = inlined_call_operand.vmem [shape: f32[32,128], index: 2, kind: input, shape index: {}]
  %s3 = inlined_call_operand.hbm [shape: f32[32,128], index: 3, kind: input, shape index: {}]
  %s4 = inlined_call_operand.vmem [shape: f32[1,128], index: 4, kind: input, shape index: {}]
  %s5 = inlined_call_operand.vmem [shape: f32[64,128], index: 5, kind: input, shape index: {}]
  %s6 = inlined_call_operand.hbm [shape: f32[1,128], index: 6, kind: input, shape index: {}]
  %s7 = inlined_call_operand.hbm [shape: f32[2,2,32], index: 7, kind: input, shape index: {}]
  %s8 = inlined_call_operand.hbm [shape: f32[2,2,32], index: 8, kind: input, shape index: {}]
  %s9 = inlined_call_operand.vmem [shape: f32[32,128], index: 9, kind: input, shape index: {}]
  %s10 = inlined_call_operand.vmem [shape: f32[1,128], index: 10, kind: input, shape index: {}]
  %s11 = inlined_call_operand.hbm [shape: f32[16,128], index: 11, kind: output, shape index: {0}]
  %s12 = inlined_call_operand.hbm [shape: f32[2,2,64], index: 12, kind: output, shape index: {1}]
  %13 = xla_tuple %s11, %s12
  %s14 = sld [smem:[#allocation0]]
  $region78: #{tpu_custom_call.1} parent=0
    _
  %s16 = ssub.s32 1, %s14
  %s17 = scalar_select 0, %s16, %s14
  $region1: #{tpu_custom_call.1} parent=0
    #allocation2 [shape = 'u8[16384]{0}', space=vmem, size = 0x4000, scoped, tag = 'input window, operand 3, single buffered']
    #allocation3 [shape = 's32[1]{0}', space=sflag, size = 0x4, scoped, tag = 'scoped memory for tpu_custom_call.1']
    #allocation4 [shape = 's32[1]{0}', space=sflag, size = 0x4, scoped, tag = 'scoped memory for tpu_custom_call.1']
    #allocation5 [shape = 'u8[512]{0}', space=vmem, size = 0x400, scoped, tag = 'input window, operand 6, single buffered']
    #allocation6 [shape = 's32[1]{0}', space=sflag, size = 0x4, scoped, tag = 'scoped memory for tpu_custom_call.1']
    #allocation7 [shape = 'u8[2048]{0}', space=vmem, size = 0x800, scoped, tag = 'input window, operand 7, single buffered']
    #allocation8 [shape = 'u8[2048]{0}', space=vmem, size = 0x800, scoped, tag = 'input window, operand 8, single buffered']
    #allocation9 [shape = 's32[1]{0}', space=sflag, size = 0x4, scoped, tag = 'scoped memory for tpu_custom_call.1']
    #allocation10 [shape = 'u8[8192]{0}', space=vmem, size = 0x2000, scoped, tag = 'output window, operand 0, single buffered']
    #allocation11 [shape = 'u8[2048]{0}', space=vmem, size = 0x800, scoped, tag = 'output window, operand 1, single buffered']
    #allocation12 [shape = 's32[1]{0}', space=sflag, size = 0x4, scoped, tag = 'scoped memory for tpu_custom_call.1']
    %18 = vsyncpa [#allocation3], 0
    %19 = vsyncpa [#allocation6], 0
    %20 = vsyncpa [#allocation9], 0
    %21 = vsyncpa [#allocation4], 0
    %22 = vsyncpa [#allocation12], 0
    // Predicated region
    $region2: #{tpu_custom_call.1} parent=1 // pred_check
      _
    $region3: #{tpu_custom_call.1} parent=1 // pred_check_branch
      %24 = sbr.rel (0) target = $region5
    $region4: #{tpu_custom_call.1} parent=1 // pred_region
      _
    $region5: #{tpu_custom_call.1} parent=1 // pred_fallthru
      _
    // Predicated region
    $region6: #{tpu_custom_call.1} parent=1 // pred_check
      _
    $region7: #{tpu_custom_call.1} parent=1 // pred_check_branch
      %26 = sbr.rel (0) target = $region9
    $region8: #{tpu_custom_call.1} parent=1 // pred_region
      _
    $region9: #{tpu_custom_call.1} parent=1 // pred_fallthru
      _
    // Predicated region
    $region10: #{tpu_custom_call.1} parent=1 // pred_check
      _
    $region11: #{tpu_custom_call.1} parent=1 // pred_check_branch
      %28 = sbr.rel (0) target = $region13
    $region12: #{tpu_custom_call.1} parent=1 // pred_region
      _
    $region13: #{tpu_custom_call.1} parent=1 // pred_fallthru
      _
    // Predicated region
    $region14: #{tpu_custom_call.1} parent=1 // pred_check
      _
    $region15: #{tpu_custom_call.1} parent=1 // pred_check_branch
      %30 = sbr.rel (0) target = $region17
    $region16: #{tpu_custom_call.1} parent=1 // pred_region
      %s32 = ssub.s32 512, 512
      %33 = vsyncadd [#allocation3], %s32
      %s34 = sshll.u32 [#allocation2], 4
      %s35 = int_to_ptr.vmem [resolvable:$true] %s34
      %40 = dma.hbm_to_vmem [thread:$0]  %s3, 512, %s35, [#allocation3], 128, 128, 8
    $region17: #{tpu_custom_call.1} parent=1 // pred_fallthru
      _
    // Predicated region
    $region18: #{tpu_custom_call.1} parent=1 // pred_check
      _
    $region19: #{tpu_custom_call.1} parent=1 // pred_check_branch
      %42 = sbr.rel (0) target = $region21
    $region20: #{tpu_custom_call.1} parent=1 // pred_region
      _
    $region21: #{tpu_custom_call.1} parent=1 // pred_fallthru
      _
    // Predicated region
    $region22: #{tpu_custom_call.1} parent=1 // pred_check
      _
    $region23: #{tpu_custom_call.1} parent=1 // pred_check_branch
      %44 = sbr.rel (0) target = $region25
    $region24: #{tpu_custom_call.1} parent=1 // pred_region
      _
    $region25: #{tpu_custom_call.1} parent=1 // pred_fallthru
      _
    // Predicated region
    $region26: #{tpu_custom_call.1} parent=1 // pred_check
      _
    $region27: #{tpu_custom_call.1} parent=1 // pred_check_branch
      %46 = sbr.rel (0) target = $region29
    $region28: #{tpu_custom_call.1} parent=1 // pred_region
      %s48 = ssub.s32 16, 16
      %49 = vsyncadd [#allocation6], %s48
      %s51 = sshll.u32 [#allocation5], 4
      %s52 = int_to_ptr.vmem [resolvable:$true] %s51
      %54 = dma.hbm_to_vmem [thread:$0]  %s6, 16, %s52, [#allocation6]
    $region29: #{tpu_custom_call.1} parent=1 // pred_fallthru
      _
    // Predicated region
    $region30: #{tpu_custom_call.1} parent=1 // pred_check
      _
    $region31: #{tpu_custom_call.1} parent=1 // pred_check_branch
      %56 = sbr.rel (0) target = $region33
    $region32: #{tpu_custom_call.1} parent=1 // pred_region
      %s58 = ssub.s32 64, 64
      %59 = vsyncadd [#allocation6], %s58
      %s60 = sshll.u32 [#allocation7], 4
      %s61 = int_to_ptr.vmem [resolvable:$true] %s60
      %66 = dma.hbm_to_vmem [thread:$0]  %s7, 64, %s61, [#allocation6], 32, 32, 2
    $region33: #{tpu_custom_call.1} parent=1 // pred_fallthru
      _
    // Predicated region
    $region34: #{tpu_custom_call.1} parent=1 // pred_check
      _
    $region35: #{tpu_custom_call.1} parent=1 // pred_check_branch
      %68 = sbr.rel (0) target = $region37
    $region36: #{tpu_custom_call.1} parent=1 // pred_region
      %s70 = ssub.s32 64, 64
      %71 = vsyncadd [#allocation9], %s70
      %s72 = sshll.u32 [#allocation8], 4
      %s73 = int_to_ptr.vmem [resolvable:$true] %s72
      %78 = dma.hbm_to_vmem [thread:$0]  %s8, 64, %s73, [#allocation9], 32, 32, 2
    $region37: #{tpu_custom_call.1} parent=1 // pred_fallthru
      _
    // Predicated region
    $region38: #{tpu_custom_call.1} parent=1 // pred_check
      _
    $region39: #{tpu_custom_call.1} parent=1 // pred_check_branch
      %80 = sbr.rel (0) target = $region41
    $region40: #{tpu_custom_call.1} parent=1 // pred_region
      _
    $region41: #{tpu_custom_call.1} parent=1 // pred_fallthru
      _
    // Predicated region
    $region42: #{tpu_custom_call.1} parent=1 // pred_check
      _
    $region43: #{tpu_custom_call.1} parent=1 // pred_check_branch
      %82 = sbr.rel (0) target = $region45
    $region44: #{tpu_custom_call.1} parent=1 // pred_region
      _
    $region45: #{tpu_custom_call.1} parent=1 // pred_fallthru
      _
    // Predicated region
    $region46: #{tpu_custom_call.1} parent=1 // pred_check
      _
    $region47: #{tpu_custom_call.1} parent=1 // pred_check_branch
      %84 = sbr.rel (0) target = $region49
    $region48: #{tpu_custom_call.1} parent=1 // pred_region
      %85 = dma.done [#allocation3], 512
    $region49: #{tpu_custom_call.1} parent=1 // pred_fallthru
      _
    // Predicated region
    $region50: #{tpu_custom_call.1} parent=1 // pred_check
      _
    $region51: #{tpu_custom_call.1} parent=1 // pred_check_branch
      %87 = sbr.rel (0) target = $region53
    $region52: #{tpu_custom_call.1} parent=1 // pred_region
      %88 = dma.done [#allocation6], 16
    $region53: #{tpu_custom_call.1} parent=1 // pred_fallthru
      _
    // Predicated region
    $region54: #{tpu_custom_call.1} parent=1 // pred_check
      _
    $region55: #{tpu_custom_call.1} parent=1 // pred_check_branch
      %90 = sbr.rel (0) target = $region57
    $region56: #{tpu_custom_call.1} parent=1 // pred_region
      %91 = dma.done [#allocation6], 64
    $region57: #{tpu_custom_call.1} parent=1 // pred_fallthru
      _
    // Predicated region
    $region58: #{tpu_custom_call.1} parent=1 // pred_check
      _
    $region59: #{tpu_custom_call.1} parent=1 // pred_check_branch
      %93 = sbr.rel (0) target = $region61
    $region60: #{tpu_custom_call.1} parent=1 // pred_region
      %94 = dma.done [#allocation9], 64
    $region61: #{tpu_custom_call.1} parent=1 // pred_fallthru
      _
    %v95 = vlaneseq
    %v96 = vand.u32 %v95, 127
    %v97 = vld [vmem:[%s0] sm:$0xff]
    %v98 = vld [vmem:[%s0 + $0x8] sm:$0xff]
    %99 = vset.pattern.permute.xlu0 0
    %100 = vperm.xlu0 %99, %v97
    %v101 = vpop.permute.xlu0 %100
    %102 = vset.pattern.permute.xlu0 0
    %103 = vperm.xlu0 %102, %v98
    %v104 = vpop.permute.xlu0 %103
    %vm105 = vcmp.eq.s32.totalorder %v96, %v101
    %vm106 = vcmp.eq.s32.totalorder %v96, %v104
    %v107 = vsel %vm105, 1, 0
    %v108 = vsel %vm106, 1, 0
    %v109 = vcvt.s32.f32 %v107
    %v110 = vcvt.s32.f32 %v108
    %v111 = vld [vmem:[%s1] sm:$0xff]
    %v112 = vld [vmem:[%s1 + $0x8] sm:$0xff]
    %v113 = vld [vmem:[%s1 + $0x10] sm:$0xff]
    %v114 = vld [vmem:[%s1 + $0x18] sm:$0xff]
    %v115 = vld [vmem:[%s1 + $0x20] sm:$0xff]
    %v116 = vld [vmem:[%s1 + $0x28] sm:$0xff]
    %v117 = vld [vmem:[%s1 + $0x30] sm:$0xff]
    %v118 = vld [vmem:[%s1 + $0x38] sm:$0xff]
    %vm119 = vcmask 523264
    %v121 = vsel %vm119, %v109, 0
    %v124 = vsel %vm119, %v110, 0
    %126 = vmatprep.subr.mxu0 0.0
    %127 = vmatpush1.msra.mxu0 0.0
    %128 = vmatprep.subr.mxu0 0.0
    %129 = vmatpush1.msra.mxu0 0.0
    %130 = vmatprep.subr.mxu0 0.0
    %131 = vmatpush1.msra.mxu0 0.0
    %132 = vmatprep.subr.mxu0 0.0
    %133 = vmatpush1.msra.mxu0 0.0
    %134 = vmatprep.subr.mxu0 0.0
    %135 = vmatpush1.msra.mxu0 0.0
    %136 = vmatprep.subr.mxu0 0.0
    %137 = vmatpush1.msra.mxu0 0.0
    %138 = vmatprep.subr.mxu0 0.0
    %139 = vmatpush1.msra.mxu0 0.0
    %140 = vmatprep.subr.mxu0 0.0
    %141 = vmatpush1.msra.mxu0 0.0
    %142 = vmatprep.subr.mxu0 0.0
    %143 = vmatpush1.msra.mxu0 %v118
    %144 = vmatprep.subr.mxu0 0.0
    %145 = vmatpush1.msra.mxu0 %v117
    %146 = vmatprep.subr.mxu0 0.0
    %147 = vmatpush1.msra.mxu0 %v116
    %148 = vmatprep.subr.mxu0 0.0
    %149 = vmatpush1.msra.mxu0 %v115
    %150 = vmatprep.subr.mxu0 0.0
    %151 = vmatpush1.msra.mxu0 %v114
    %152 = vmatprep.subr.mxu0 0.0
    %153 = vmatpush1.msra.mxu0 %v113
    %154 = vmatprep.subr.mxu0 0.0
    %155 = vmatpush1.msra.mxu0 %v112
    %156 = vmatprep.subr.mxu0 0.0
    %157 = vmatpush1.msra.mxu0 %v111
    %158 = vmatprep.subr.mxu0 0.0
    %159 = vmatpush2.msra.mxu0 0.0
    %160 = vmatprep.subr.mxu0 0.0
    %161 = vmatpush2.msra.mxu0 0.0
    %162 = vmatprep.subr.mxu0 0.0
    %163 = vmatpush2.msra.mxu0 0.0
    %164 = vmatprep.subr.mxu0 0.0
    %165 = vmatpush2.msra.mxu0 0.0
    %166 = vmatprep.subr.mxu0 0.0
    %167 = vmatpush2.msra.mxu0 0.0
    %168 = vmatprep.subr.mxu0 0.0
    %169 = vmatpush2.msra.mxu0 0.0
    %170 = vmatprep.subr.mxu0 0.0
    %171 = vmatpush2.msra.mxu0 0.0
    %172 = vmatprep.subr.mxu0 0.0
    %173 = vmatpush2.msra.mxu0 0.0
    %174 = vmatprep.subr.mxu0 0.0
    %175 = vmatpush2.msra.mxu0 0.0
    %176 = vmatprep.subr.mxu0 0.0
    %177 = vmatpush2.msra.mxu0 0.0
    %178 = vmatprep.subr.mxu0 0.0
    %179 = vmatpush2.msra.mxu0 0.0
    %180 = vmatprep.subr.mxu0 0.0
    %181 = vmatpush2.msra.mxu0 0.0
    %182 = vmatprep.subr.mxu0 0.0
    %183 = vmatpush2.msra.mxu0 0.0
    %184 = vmatprep.subr.mxu0 0.0
    %185 = vmatpush2.msra.mxu0 0.0
    %186 = vmatprep.subr.mxu0 0.0
    %187 = vmatpush2.msra.mxu0 0.0
    %188 = vmatprep.subr.mxu0 0.0
    %189 = vmatpush2.msra.mxu0 0.0
    %190 = vmatprep.mubr.f32.mxu0 0.0
    %191 = vmatmul.mubr.f32.gmra.mxu0 %v121
    %v192 = vpop.f32.mrf.mxu0
    %v193 = vadd.f32 0.0, %v192
    %v194 = vpop.f32.mrf.mxu0
    %195 = vmatprep.mubr.f32.mxu0 0.0
    %196 = vmatmul.mubr.f32.gmra.mxu0 %v124
    %v197 = vpop.f32.mrf.mxu0
    %v198 = vadd.f32 0.0, %v197
    %v199 = vpop.f32.mrf.mxu0
    %200 = vdwg.mxu0
    %v201 = vld [vmem:[%s2] sm:$0xff]
    %v202 = vld [vmem:[%s2 + $0x8] sm:$0xff]
    %v203 = vld [vmem:[%s2 + $0x10] sm:$0xff]
    %v204 = vld [vmem:[%s2 + $0x18] sm:$0xff]
    %v205 = vld [vmem:[%s4] sm:$0x1]
    %v207 = vlaneseq
    %v208 = vshrl.u32 %v207, 7
    %v209 = vsub.s32 0, %v208
    %v210 = vrot.slane %v205, %v209
    %vm212 = vcmask 261120
    %v214 = vsel %vm212, %v193, 0
    %v217 = vsel %vm212, %v198, 0
    %219 = vmatprep.subr.mxu0 0.0
    %220 = vmatpush1.msra.mxu0 0.0
    %221 = vmatprep.subr.mxu0 0.0
    %222 = vmatpush1.msra.mxu0 0.0
    %223 = vmatprep.subr.mxu0 0.0
    %224 = vmatpush1.msra.mxu0 0.0
    %225 = vmatprep.subr.mxu0 0.0
    %226 = vmatpush1.msra.mxu0 0.0
    %227 = vmatprep.subr.mxu0 0.0
    %228 = vmatpush1.msra.mxu0 0.0
    %229 = vmatprep.subr.mxu0 0.0
    %230 = vmatpush1.msra.mxu0 0.0
    %231 = vmatprep.subr.mxu0 0.0
    %232 = vmatpush1.msra.mxu0 0.0
    %233 = vmatprep.subr.mxu0 0.0
    %234 = vmatpush1.msra.mxu0 0.0
    %235 = vmatprep.subr.mxu0 0.0
    %236 = vmatpush1.msra.mxu0 0.0
    %237 = vmatprep.subr.mxu0 0.0
    %238 = vmatpush1.msra.mxu0 0.0
    %239 = vmatprep.subr.mxu0 0.0
    %240 = vmatpush1.msra.mxu0 0.0
    %241 = vmatprep.subr.mxu0 0.0
    %242 = vmatpush1.msra.mxu0 0.0
    %243 = vmatprep.subr.mxu0 0.0
    %244 = vmatpush1.msra.mxu0 %v204
    %245 = vmatprep.subr.mxu0 0.0
    %246 = vmatpush1.msra.mxu0 %v203
    %247 = vmatprep.subr.mxu0 0.0
    %248 = vmatpush1.msra.mxu0 %v202
    %249 = vmatprep.subr.mxu0 0.0
    %250 = vmatpush1.msra.mxu0 %v201
    %251 = vmatprep.subr.mxu0 0.0
    %252 = vmatpush2.msra.mxu0 0.0
    %253 = vmatprep.subr.mxu0 0.0
    %254 = vmatpush2.msra.mxu0 0.0
    %255 = vmatprep.subr.mxu0 0.0
    %256 = vmatpush2.msra.mxu0 0.0
    %257 = vmatprep.subr.mxu0 0.0
    %258 = vmatpush2.msra.mxu0 0.0
    %259 = vmatprep.subr.mxu0 0.0
    %260 = vmatpush2.msra.mxu0 0.0
    %261 = vmatprep.subr.mxu0 0.0
    %262 = vmatpush2.msra.mxu0 0.0
    %263 = vmatprep.subr.mxu0 0.0
    %264 = vmatpush2.msra.mxu0 0.0
    %265 = vmatprep.subr.mxu0 0.0
    %266 = vmatpush2.msra.mxu0 0.0
    %267 = vmatprep.subr.mxu0 0.0
    %268 = vmatpush2.msra.mxu0 0.0
    %269 = vmatprep.subr.mxu0 0.0
    %270 = vmatpush2.msra.mxu0 0.0
    %271 = vmatprep.subr.mxu0 0.0
    %272 = vmatpush2.msra.mxu0 0.0
    %273 = vmatprep.subr.mxu0 0.0
    %274 = vmatpush2.msra.mxu0 0.0
    %275 = vmatprep.subr.mxu0 0.0
    %276 = vmatpush2.msra.mxu0 0.0
    %277 = vmatprep.subr.mxu0 0.0
    %278 = vmatpush2.msra.mxu0 0.0
    %279 = vmatprep.subr.mxu0 0.0
    %280 = vmatpush2.msra.mxu0 0.0
    %281 = vmatprep.subr.mxu0 0.0
    %282 = vmatpush2.msra.mxu0 0.0
    %283 = vmatprep.mubr.f32.mxu0 0.0
    %284 = vmatmul.mubr.f32.gmra.mxu0 %v214
    %v285 = vpop.f32.mrf.mxu0
    %v286 = vadd.f32 %v210, %v285
    %v287 = vpop.f32.mrf.mxu0
    %288 = vmatprep.mubr.f32.mxu0 0.0
    %289 = vmatmul.mubr.f32.gmra.mxu0 %v217
    %v290 = vpop.f32.mrf.mxu0
    %v291 = vadd.f32 %v210, %v290
    %v292 = vpop.f32.mrf.mxu0
    %293 = vdwg.mxu0
    %v294 = vld [vmem:[#allocation2] sm:$0xff]
    %v295 = vld [vmem:[#allocation2 + $0x8] sm:$0xff]
    %v296 = vld [vmem:[#allocation2 + $0x10] sm:$0xff]
    %v297 = vld [vmem:[#allocation2 + $0x18] sm:$0xff]
    %v298 = vld [vmem:[%s5] sm:$0xff]
    %v299 = vld [vmem:[%s5 + $0x8] sm:$0xff]
    %v300 = vld [vmem:[%s5 + $0x10] sm:$0xff]
    %v301 = vld [vmem:[%s5 + $0x18] sm:$0xff]
    %v302 = vld [vmem:[%s5 + $0x20] sm:$0xff]
    %v303 = vld [vmem:[%s5 + $0x28] sm:$0xff]
    %v304 = vld [vmem:[%s5 + $0x30] sm:$0xff]
    %v305 = vld [vmem:[%s5 + $0x38] sm:$0xff]
    %v306 = vld [vmem:[#allocation5] sm:$0x1]
    %v308 = vlaneseq
    %v309 = vshrl.u32 %v308, 7
    %v310 = vsub.s32 0, %v309
    %v311 = vrot.slane %v306, %v310
    %v313 = vld [vmem:[#allocation7] sm:$0x3]
    %v314 = vld [vmem:[#allocation8] sm:$0x3]
    %s315 = scalar_lea.vmem [#allocation7], 2
    %v316 = vld [vmem:[%s315] sm:$0x3]
    %s317 = scalar_lea.vmem [#allocation8], 2
    %v318 = vld [vmem:[%s317] sm:$0x3]
    %v320 = vsel %vm212, %v313, 0
    %322 = vmatprep.subr.mxu0 0.0
    %323 = vmatpush1.msra.mxu0 0.0
    %324 = vmatprep.subr.mxu0 0.0
    %325 = vmatpush1.msra.mxu0 0.0
    %326 = vmatprep.subr.mxu0 0.0
    %327 = vmatpush1.msra.mxu0 0.0
    %328 = vmatprep.subr.mxu0 0.0
    %329 = vmatpush1.msra.mxu0 0.0
    %330 = vmatprep.subr.mxu0 0.0
    %331 = vmatpush1.msra.mxu0 0.0
    %332 = vmatprep.subr.mxu0 0.0
    %333 = vmatpush1.msra.mxu0 0.0
    %334 = vmatprep.subr.mxu0 0.0
    %335 = vmatpush1.msra.mxu0 0.0
    %336 = vmatprep.subr.mxu0 0.0
    %337 = vmatpush1.msra.mxu0 0.0
    %338 = vmatprep.subr.mxu0 0.0
    %339 = vmatpush1.msra.mxu0 0.0
    %340 = vmatprep.subr.mxu0 0.0
    %341 = vmatpush1.msra.mxu0 0.0
    %342 = vmatprep.subr.mxu0 0.0
    %343 = vmatpush1.msra.mxu0 0.0
    %344 = vmatprep.subr.mxu0 0.0
    %345 = vmatpush1.msra.mxu0 0.0
    %346 = vmatprep.subr.mxu0 0.0
    %347 = vmatpush1.msra.mxu0 %v297
    %348 = vmatprep.subr.mxu0 0.0
    %349 = vmatpush1.msra.mxu0 %v296
    %350 = vmatprep.subr.mxu0 0.0
    %351 = vmatpush1.msra.mxu0 %v295
    %352 = vmatprep.subr.mxu0 0.0
    %353 = vmatpush1.msra.mxu0 %v294
    %354 = vmatprep.subr.mxu0 0.0
    %355 = vmatpush2.msra.mxu0 0.0
    %356 = vmatprep.subr.mxu0 0.0
    %357 = vmatpush2.msra.mxu0 0.0
    %358 = vmatprep.subr.mxu0 0.0
    %359 = vmatpush2.msra.mxu0 0.0
    %360 = vmatprep.subr.mxu0 0.0
    %361 = vmatpush2.msra.mxu0 0.0
    %362 = vmatprep.subr.mxu0 0.0
    %363 = vmatpush2.msra.mxu0 0.0
    %364 = vmatprep.subr.mxu0 0.0
    %365 = vmatpush2.msra.mxu0 0.0
    %366 = vmatprep.subr.mxu0 0.0
    %367 = vmatpush2.msra.mxu0 0.0
    %368 = vmatprep.subr.mxu0 0.0
    %369 = vmatpush2.msra.mxu0 0.0
    %370 = vmatprep.subr.mxu0 0.0
    %371 = vmatpush2.msra.mxu0 0.0
    %372 = vmatprep.subr.mxu0 0.0
    %373 = vmatpush2.msra.mxu0 0.0
    %374 = vmatprep.subr.mxu0 0.0
    %375 = vmatpush2.msra.mxu0 0.0
    %376 = vmatprep.subr.mxu0 0.0
    %377 = vmatpush2.msra.mxu0 0.0
    %378 = vmatprep.subr.mxu0 0.0
    %379 = vmatpush2.msra.mxu0 0.0
    %380 = vmatprep.subr.mxu0 0.0
    %381 = vmatpush2.msra.mxu0 0.0
    %382 = vmatprep.subr.mxu0 0.0
    %383 = vmatpush2.msra.mxu0 0.0
    %384 = vmatprep.subr.mxu0 0.0
    %385 = vmatpush2.msra.mxu0 0.0
    %386 = vmatprep.mubr.f32.mxu0 0.0
    %387 = vmatmul.mubr.f32.gmra.mxu0 %v320
    %v388 = vpop.f32.mrf.mxu0
    %v389 = vadd.f32 0.0, %v388
    %v390 = vpop.f32.mrf.mxu0
    %391 = vdwg.mxu0
    %v392 = vadd.f32 %v286, %v389
    %v393 = vxor.u32 %v392, 2147483648
    %v394 = vmul.f32 %v393, 1.442695
    %v395 = vpow.pop %v394
    %v396 = vadd.f32 %v395, 1.0
    %v397 = vrcp.pop %v396
    %v398 = vmul.f32 1.0, %v397
    %v399 = vtanh.pop %v392
    %401 = vrot.lane.b32.xlu0 %v314, 32
    %v402 = vpop.permute.xlu0 %401
    %v404 = vmul.f32 %v398, %v402
    %406 = vrot.lane.b32.xlu0 %v399, 64
    %v407 = vpop.permute.xlu0 %406
    %v409 = vmul.f32 %v398, %v407
    %411 = vrot.lane.b32.xlu0 %v409, 32
    %v412 = vpop.permute.xlu0 %411
    %v414 = vadd.f32 %v404, %v412
    %v415 = vtanh.pop %v414
    %417 = vrot.lane.b32.xlu0 %v415, 64
    %v418 = vpop.permute.xlu0 %417
    %v420 = vmul.f32 %v398, %v418
    %422 = vrot.lane.b32.xlu0 %v420, 32
    %v423 = vpop.permute.xlu0 %422
    %v424 = vsel %vm212, %v423, 0
    %426 = vmatprep.subr.mxu0 0.0
    %427 = vmatpush1.msra.mxu0 0.0
    %428 = vmatprep.subr.mxu0 0.0
    %429 = vmatpush1.msra.mxu0 0.0
    %430 = vmatprep.subr.mxu0 0.0
    %431 = vmatpush1.msra.mxu0 0.0
    %432 = vmatprep.subr.mxu0 0.0
    %433 = vmatpush1.msra.mxu0 0.0
    %434 = vmatprep.subr.mxu0 0.0
    %435 = vmatpush1.msra.mxu0 0.0
    %436 = vmatprep.subr.mxu0 0.0
    %437 = vmatpush1.msra.mxu0 0.0
    %438 = vmatprep.subr.mxu0 0.0
    %439 = vmatpush1.msra.mxu0 0.0
    %440 = vmatprep.subr.mxu0 0.0
    %441 = vmatpush1.msra.mxu0 0.0
    %442 = vmatprep.subr.mxu0 0.0
    %443 = vmatpush1.msra.mxu0 0.0
    %444 = vmatprep.subr.mxu0 0.0
    %445 = vmatpush1.msra.mxu0 0.0
    %446 = vmatprep.subr.mxu0 0.0
    %447 = vmatpush1.msra.mxu0 0.0
    %448 = vmatprep.subr.mxu0 0.0
    %449 = vmatpush1.msra.mxu0 0.0
    %450 = vmatprep.subr.mxu0 0.0
    %451 = vmatpush1.msra.mxu0 %v297
    %452 = vmatprep.subr.mxu0 0.0
    %453 = vmatpush1.msra.mxu0 %v296
    %454 = vmatprep.subr.mxu0 0.0
    %455 = vmatpush1.msra.mxu0 %v295
    %456 = vmatprep.subr.mxu0 0.0
    %457 = vmatpush1.msra.mxu0 %v294
    %458 = vmatprep.subr.mxu0 0.0
    %459 = vmatpush2.msra.mxu0 0.0
    %460 = vmatprep.subr.mxu0 0.0
    %461 = vmatpush2.msra.mxu0 0.0
    %462 = vmatprep.subr.mxu0 0.0
    %463 = vmatpush2.msra.mxu0 0.0
    %464 = vmatprep.subr.mxu0 0.0
    %465 = vmatpush2.msra.mxu0 0.0
    %466 = vmatprep.subr.mxu0 0.0
    %467 = vmatpush2.msra.mxu0 0.0
    %468 = vmatprep.subr.mxu0 0.0
    %469 = vmatpush2.msra.mxu0 0.0
    %470 = vmatprep.subr.mxu0 0.0
    %471 = vmatpush2.msra.mxu0 0.0
    %472 = vmatprep.subr.mxu0 0.0
    %473 = vmatpush2.msra.mxu0 0.0
    %474 = vmatprep.subr.mxu0 0.0
    %475 = vmatpush2.msra.mxu0 0.0
    %476 = vmatprep.subr.mxu0 0.0
    %477 = vmatpush2.msra.mxu0 0.0
    %478 = vmatprep.subr.mxu0 0.0
    %479 = vmatpush2.msra.mxu0 0.0
    %480 = vmatprep.subr.mxu0 0.0
    %481 = vmatpush2.msra.mxu0 0.0
    %482 = vmatprep.subr.mxu0 0.0
    %483 = vmatpush2.msra.mxu0 0.0
    %484 = vmatprep.subr.mxu0 0.0
    %485 = vmatpush2.msra.mxu0 0.0
    %486 = vmatprep.subr.mxu0 0.0
    %487 = vmatpush2.msra.mxu0 0.0
    %488 = vmatprep.subr.mxu0 0.0
    %489 = vmatpush2.msra.mxu0 0.0
    %490 = vmatprep.mubr.f32.mxu0 0.0
    %491 = vmatmul.mubr.f32.gmra.mxu0 %v424
    %v492 = vpop.f32.mrf.mxu0
    %v493 = vadd.f32 0.0, %v492
    %v494 = vpop.f32.mrf.mxu0
    %495 = vdwg.mxu0
    %v497 = vrot.slane %v493, 6
    %v499 = vadd.f32 %v286, %v497
    %v500 = vxor.u32 %v499, 2147483648
    %v501 = vmul.f32 %v500, 1.442695
    %v502 = vpow.pop %v501
    %v503 = vadd.f32 %v502, 1.0
    %v504 = vrcp.pop %v503
    %v505 = vmul.f32 1.0, %v504
    %v506 = vtanh.pop %v499
    %v508 = vrot.slane %v414, 6
    %v510 = vmul.f32 %v505, %v508
    %512 = vrot.lane.b32.xlu0 %v506, 64
    %v513 = vpop.permute.xlu0 %512
    %v515 = vmul.f32 %v505, %v513
    %517 = vrot.lane.b32.xlu0 %v515, 32
    %v518 = vpop.permute.xlu0 %517
    %v520 = vadd.f32 %v510, %v518
    %v521 = vtanh.pop %v520
    %523 = vrot.lane.b32.xlu0 %v521, 64
    %v524 = vpop.permute.xlu0 %523
    %v526 = vmul.f32 %v505, %v524
    %529 = vrot.lane.b32.xlu0 %v316, 32
    %v530 = vpop.permute.xlu0 %529
    %v532 = vsel %vm212, %v423, %v530
    %v534 = vsel %vm119, %v532, 0
    %536 = vmatprep.subr.mxu0 0.0
    %537 = vmatpush1.msra.mxu0 0.0
    %538 = vmatprep.subr.mxu0 0.0
    %539 = vmatpush1.msra.mxu0 0.0
    %540 = vmatprep.subr.mxu0 0.0
    %541 = vmatpush1.msra.mxu0 0.0
    %542 = vmatprep.subr.mxu0 0.0
    %543 = vmatpush1.msra.mxu0 0.0
    %544 = vmatprep.subr.mxu0 0.0
    %545 = vmatpush1.msra.mxu0 0.0
    %546 = vmatprep.subr.mxu0 0.0
    %547 = vmatpush1.msra.mxu0 0.0
    %548 = vmatprep.subr.mxu0 0.0
    %549 = vmatpush1.msra.mxu0 0.0
    %550 = vmatprep.subr.mxu0 0.0
    %551 = vmatpush1.msra.mxu0 0.0
    %552 = vmatprep.subr.mxu0 0.0
    %553 = vmatpush1.msra.mxu0 %v305
    %554 = vmatprep.subr.mxu0 0.0
    %555 = vmatpush1.msra.mxu0 %v304
    %556 = vmatprep.subr.mxu0 0.0
    %557 = vmatpush1.msra.mxu0 %v303
    %558 = vmatprep.subr.mxu0 0.0
    %559 = vmatpush1.msra.mxu0 %v302
    %560 = vmatprep.subr.mxu0 0.0
    %561 = vmatpush1.msra.mxu0 %v301
    %562 = vmatprep.subr.mxu0 0.0
    %563 = vmatpush1.msra.mxu0 %v300
    %564 = vmatprep.subr.mxu0 0.0
    %565 = vmatpush1.msra.mxu0 %v299
    %566 = vmatprep.subr.mxu0 0.0
    %567 = vmatpush1.msra.mxu0 %v298
    %568 = vmatprep.subr.mxu0 0.0
    %569 = vmatpush2.msra.mxu0 0.0
    %570 = vmatprep.subr.mxu0 0.0
    %571 = vmatpush2.msra.mxu0 0.0
    %572 = vmatprep.subr.mxu0 0.0
    %573 = vmatpush2.msra.mxu0 0.0
    %574 = vmatprep.subr.mxu0 0.0
    %575 = vmatpush2.msra.mxu0 0.0
    %576 = vmatprep.subr.mxu0 0.0
    %577 = vmatpush2.msra.mxu0 0.0
    %578 = vmatprep.subr.mxu0 0.0
    %579 = vmatpush2.msra.mxu0 0.0
    %580 = vmatprep.subr.mxu0 0.0
    %581 = vmatpush2.msra.mxu0 0.0
    %582 = vmatprep.subr.mxu0 0.0
    %583 = vmatpush2.msra.mxu0 0.0
    %584 = vmatprep.subr.mxu0 0.0
    %585 = vmatpush2.msra.mxu0 0.0
    %586 = vmatprep.subr.mxu0 0.0
    %587 = vmatpush2.msra.mxu0 0.0
    %588 = vmatprep.subr.mxu0 0.0
    %589 = vmatpush2.msra.mxu0 0.0
    %590 = vmatprep.subr.mxu0 0.0
    %591 = vmatpush2.msra.mxu0 0.0
    %592 = vmatprep.subr.mxu0 0.0
    %593 = vmatpush2.msra.mxu0 0.0
    %594 = vmatprep.subr.mxu0 0.0
    %595 = vmatpush2.msra.mxu0 0.0
    %596 = vmatprep.subr.mxu0 0.0
    %597 = vmatpush2.msra.mxu0 0.0
    %598 = vmatprep.subr.mxu0 0.0
    %599 = vmatpush2.msra.mxu0 0.0
    %600 = vmatprep.mubr.f32.mxu0 0.0
    %601 = vmatmul.mubr.f32.gmra.mxu0 %v534
    %v602 = vpop.f32.mrf.mxu0
    %v603 = vadd.f32 %v311, %v602
    %v604 = vpop.f32.mrf.mxu0
    %605 = vdwg.mxu0
    %v606 = vxor.u32 %v603, 2147483648
    %v607 = vmul.f32 %v606, 1.442695
    %v608 = vpow.pop %v607
    %v609 = vadd.f32 %v608, 1.0
    %v610 = vrcp.pop %v609
    %v611 = vmul.f32 1.0, %v610
    %v612 = vtanh.pop %v603
    %614 = vrot.lane.b32.xlu0 %v318, 32
    %v615 = vpop.permute.xlu0 %614
    %v617 = vmul.f32 %v611, %v615
    %619 = vrot.lane.b32.xlu0 %v612, 64
    %v620 = vpop.permute.xlu0 %619
    %v622 = vmul.f32 %v611, %v620
    %624 = vrot.lane.b32.xlu0 %v622, 32
    %v625 = vpop.permute.xlu0 %624
    %v627 = vadd.f32 %v617, %v625
    %v628 = vtanh.pop %v627
    %630 = vrot.lane.b32.xlu0 %v628, 64
    %v631 = vpop.permute.xlu0 %630
    %v633 = vmul.f32 %v611, %v631
    %v635 = vrot.slane %v526, 2
    %636 = vrot.lane.b32.xlu0 %v635, 32
    %v637 = vpop.permute.xlu0 %636
    %v638 = vsel %vm212, %v637, 0
    %640 = vmatprep.subr.mxu0 0.0
    %641 = vmatpush1.msra.mxu0 0.0
    %642 = vmatprep.subr.mxu0 0.0
    %643 = vmatpush1.msra.mxu0 0.0
    %644 = vmatprep.subr.mxu0 0.0
    %645 = vmatpush1.msra.mxu0 0.0
    %646 = vmatprep.subr.mxu0 0.0
    %647 = vmatpush1.msra.mxu0 0.0
    %648 = vmatprep.subr.mxu0 0.0
    %649 = vmatpush1.msra.mxu0 0.0
    %650 = vmatprep.subr.mxu0 0.0
    %651 = vmatpush1.msra.mxu0 0.0
    %652 = vmatprep.subr.mxu0 0.0
    %653 = vmatpush1.msra.mxu0 0.0
    %654 = vmatprep.subr.mxu0 0.0
    %655 = vmatpush1.msra.mxu0 0.0
    %656 = vmatprep.subr.mxu0 0.0
    %657 = vmatpush1.msra.mxu0 0.0
    %658 = vmatprep.subr.mxu0 0.0
    %659 = vmatpush1.msra.mxu0 0.0
    %660 = vmatprep.subr.mxu0 0.0
    %661 = vmatpush1.msra.mxu0 0.0
    %662 = vmatprep.subr.mxu0 0.0
    %663 = vmatpush1.msra.mxu0 0.0
    %664 = vmatprep.subr.mxu0 0.0
    %665 = vmatpush1.msra.mxu0 %v297
    %666 = vmatprep.subr.mxu0 0.0
    %667 = vmatpush1.msra.mxu0 %v296
    %668 = vmatprep.subr.mxu0 0.0
    %669 = vmatpush1.msra.mxu0 %v295
    %670 = vmatprep.subr.mxu0 0.0
    %671 = vmatpush1.msra.mxu0 %v294
    %672 = vmatprep.subr.mxu0 0.0
    %673 = vmatpush2.msra.mxu0 0.0
    %674 = vmatprep.subr.mxu0 0.0
    %675 = vmatpush2.msra.mxu0 0.0
    %676 = vmatprep.subr.mxu0 0.0
    %677 = vmatpush2.msra.mxu0 0.0
    %678 = vmatprep.subr.mxu0 0.0
    %679 = vmatpush2.msra.mxu0 0.0
    %680 = vmatprep.subr.mxu0 0.0
    %681 = vmatpush2.msra.mxu0 0.0
    %682 = vmatprep.subr.mxu0 0.0
    %683 = vmatpush2.msra.mxu0 0.0
    %684 = vmatprep.subr.mxu0 0.0
    %685 = vmatpush2.msra.mxu0 0.0
    %686 = vmatprep.subr.mxu0 0.0
    %687 = vmatpush2.msra.mxu0 0.0
    %688 = vmatprep.subr.mxu0 0.0
    %689 = vmatpush2.msra.mxu0 0.0
    %690 = vmatprep.subr.mxu0 0.0
    %691 = vmatpush2.msra.mxu0 0.0
    %692 = vmatprep.subr.mxu0 0.0
    %693 = vmatpush2.msra.mxu0 0.0
    %694 = vmatprep.subr.mxu0 0.0
    %695 = vmatpush2.msra.mxu0 0.0
    %696 = vmatprep.subr.mxu0 0.0
    %697 = vmatpush2.msra.mxu0 0.0
    %698 = vmatprep.subr.mxu0 0.0
    %699 = vmatpush2.msra.mxu0 0.0
    %700 = vmatprep.subr.mxu0 0.0
    %701 = vmatpush2.msra.mxu0 0.0
    %702 = vmatprep.subr.mxu0 0.0
    %703 = vmatpush2.msra.mxu0 0.0
    %704 = vmatprep.mubr.f32.mxu0 0.0
    %705 = vmatmul.mubr.f32.gmra.mxu0 %v638
    %v706 = vpop.f32.mrf.mxu0
    %v707 = vadd.f32 0.0, %v706
    %v708 = vpop.f32.mrf.mxu0
    %709 = vdwg.mxu0
    %v711 = vrot.slane %v707, 4
    %v713 = vadd.f32 %v286, %v711
    %v714 = vxor.u32 %v713, 2147483648
    %v715 = vmul.f32 %v714, 1.442695
    %v716 = vpow.pop %v715
    %v717 = vadd.f32 %v716, 1.0
    %v718 = vrcp.pop %v717
    %v719 = vmul.f32 1.0, %v718
    %v720 = vtanh.pop %v713
    %v722 = vrot.slane %v520, 6
    %v724 = vmul.f32 %v719, %v722
    %726 = vrot.lane.b32.xlu0 %v720, 64
    %v727 = vpop.permute.xlu0 %726
    %v729 = vmul.f32 %v719, %v727
    %731 = vrot.lane.b32.xlu0 %v729, 32
    %v732 = vpop.permute.xlu0 %731
    %v734 = vadd.f32 %v724, %v732
    %v735 = vtanh.pop %v734
    %737 = vrot.lane.b32.xlu0 %v735, 64
    %v738 = vpop.permute.xlu0 %737
    %v740 = vmul.f32 %v719, %v738
    %741 = vrot.lane.b32.xlu0 %v526, 32
    %v742 = vpop.permute.xlu0 %741
    %v745 = vrot.slane %v633, 6
    %746 = vrot.lane.b32.xlu0 %v745, 64
    %v747 = vpop.permute.xlu0 %746
    %v749 = vsel %vm212, %v742, %v747
    %v751 = vrot.slane %v749, 2
    %v752 = vsel %vm119, %v751, 0
    %754 = vmatprep.subr.mxu0 0.0
    %755 = vmatpush1.msra.mxu0 0.0
    %756 = vmatprep.subr.mxu0 0.0
    %757 = vmatpush1.msra.mxu0 0.0
    %758 = vmatprep.subr.mxu0 0.0
    %759 = vmatpush1.msra.mxu0 0.0
    %760 = vmatprep.subr.mxu0 0.0
    %761 = vmatpush1.msra.mxu0 0.0
    %762 = vmatprep.subr.mxu0 0.0
    %763 = vmatpush1.msra.mxu0 0.0
    %764 = vmatprep.subr.mxu0 0.0
    %765 = vmatpush1.msra.mxu0 0.0
    %766 = vmatprep.subr.mxu0 0.0
    %767 = vmatpush1.msra.mxu0 0.0
    %768 = vmatprep.subr.mxu0 0.0
    %769 = vmatpush1.msra.mxu0 0.0
    %770 = vmatprep.subr.mxu0 0.0
    %771 = vmatpush1.msra.mxu0 %v305
    %772 = vmatprep.subr.mxu0 0.0
    %773 = vmatpush1.msra.mxu0 %v304
    %774 = vmatprep.subr.mxu0 0.0
    %775 = vmatpush1.msra.mxu0 %v303
    %776 = vmatprep.subr.mxu0 0.0
    %777 = vmatpush1.msra.mxu0 %v302
    %778 = vmatprep.subr.mxu0 0.0
    %779 = vmatpush1.msra.mxu0 %v301
    %780 = vmatprep.subr.mxu0 0.0
    %781 = vmatpush1.msra.mxu0 %v300
    %782 = vmatprep.subr.mxu0 0.0
    %783 = vmatpush1.msra.mxu0 %v299
    %784 = vmatprep.subr.mxu0 0.0
    %785 = vmatpush1.msra.mxu0 %v298
    %786 = vmatprep.subr.mxu0 0.0
    %787 = vmatpush2.msra.mxu0 0.0
    %788 = vmatprep.subr.mxu0 0.0
    %789 = vmatpush2.msra.mxu0 0.0
    %790 = vmatprep.subr.mxu0 0.0
    %791 = vmatpush2.msra.mxu0 0.0
    %792 = vmatprep.subr.mxu0 0.0
    %793 = vmatpush2.msra.mxu0 0.0
    %794 = vmatprep.subr.mxu0 0.0
    %795 = vmatpush2.msra.mxu0 0.0
    %796 = vmatprep.subr.mxu0 0.0
    %797 = vmatpush2.msra.mxu0 0.0
    %798 = vmatprep.subr.mxu0 0.0
    %799 = vmatpush2.msra.mxu0 0.0
    %800 = vmatprep.subr.mxu0 0.0
    %801 = vmatpush2.msra.mxu0 0.0
    %802 = vmatprep.subr.mxu0 0.0
    %803 = vmatpush2.msra.mxu0 0.0
    %804 = vmatprep.subr.mxu0 0.0
    %805 = vmatpush2.msra.mxu0 0.0
    %806 = vmatprep.subr.mxu0 0.0
    %807 = vmatpush2.msra.mxu0 0.0
    %808 = vmatprep.subr.mxu0 0.0
    %809 = vmatpush2.msra.mxu0 0.0
    %810 = vmatprep.subr.mxu0 0.0
    %811 = vmatpush2.msra.mxu0 0.0
    %812 = vmatprep.subr.mxu0 0.0
    %813 = vmatpush2.msra.mxu0 0.0
    %814 = vmatprep.subr.mxu0 0.0
    %815 = vmatpush2.msra.mxu0 0.0
    %816 = vmatprep.subr.mxu0 0.0
    %817 = vmatpush2.msra.mxu0 0.0
    %818 = vmatprep.mubr.f32.mxu0 0.0
    %819 = vmatmul.mubr.f32.gmra.mxu0 %v752
    %v820 = vpop.f32.mrf.mxu0
    %v821 = vadd.f32 %v311, %v820
    %v822 = vpop.f32.mrf.mxu0
    %823 = vdwg.mxu0
    %v824 = vxor.u32 %v821, 2147483648
    %v825 = vmul.f32 %v824, 1.442695
    %v826 = vpow.pop %v825
    %v827 = vadd.f32 %v826, 1.0
    %v828 = vrcp.pop %v827
    %v829 = vmul.f32 1.0, %v828
    %v830 = vtanh.pop %v821
    %v831 = vmul.f32 %v829, %v627
    %833 = vrot.lane.b32.xlu0 %v830, 64
    %v834 = vpop.permute.xlu0 %833
    %v836 = vmul.f32 %v829, %v834
    %838 = vrot.lane.b32.xlu0 %v836, 32
    %v839 = vpop.permute.xlu0 %838
    %v841 = vadd.f32 %v831, %v839
    %v842 = vtanh.pop %v841
    %844 = vrot.lane.b32.xlu0 %v842, 64
    %v845 = vpop.permute.xlu0 %844
    %v847 = vmul.f32 %v829, %v845
    %v849 = vrot.slane %v740, 4
    %850 = vrot.lane.b32.xlu0 %v849, 32
    %v851 = vpop.permute.xlu0 %850
    %v852 = vsel %vm212, %v851, 0
    %854 = vmatprep.subr.mxu0 0.0
    %855 = vmatpush1.msra.mxu0 0.0
    %856 = vmatprep.subr.mxu0 0.0
    %857 = vmatpush1.msra.mxu0 0.0
    %858 = vmatprep.subr.mxu0 0.0
    %859 = vmatpush1.msra.mxu0 0.0
    %860 = vmatprep.subr.mxu0 0.0
    %861 = vmatpush1.msra.mxu0 0.0
    %862 = vmatprep.subr.mxu0 0.0
    %863 = vmatpush1.msra.mxu0 0.0
    %864 = vmatprep.subr.mxu0 0.0
    %865 = vmatpush1.msra.mxu0 0.0
    %866 = vmatprep.subr.mxu0 0.0
    %867 = vmatpush1.msra.mxu0 0.0
    %868 = vmatprep.subr.mxu0 0.0
    %869 = vmatpush1.msra.mxu0 0.0
    %870 = vmatprep.subr.mxu0 0.0
    %871 = vmatpush1.msra.mxu0 0.0
    %872 = vmatprep.subr.mxu0 0.0
    %873 = vmatpush1.msra.mxu0 0.0
    %874 = vmatprep.subr.mxu0 0.0
    %875 = vmatpush1.msra.mxu0 0.0
    %876 = vmatprep.subr.mxu0 0.0
    %877 = vmatpush1.msra.mxu0 0.0
    %878 = vmatprep.subr.mxu0 0.0
    %879 = vmatpush1.msra.mxu0 %v297
    %880 = vmatprep.subr.mxu0 0.0
    %881 = vmatpush1.msra.mxu0 %v296
    %882 = vmatprep.subr.mxu0 0.0
    %883 = vmatpush1.msra.mxu0 %v295
    %884 = vmatprep.subr.mxu0 0.0
    %885 = vmatpush1.msra.mxu0 %v294
    %886 = vmatprep.subr.mxu0 0.0
    %887 = vmatpush2.msra.mxu0 0.0
    %888 = vmatprep.subr.mxu0 0.0
    %889 = vmatpush2.msra.mxu0 0.0
    %890 = vmatprep.subr.mxu0 0.0
    %891 = vmatpush2.msra.mxu0 0.0
    %892 = vmatprep.subr.mxu0 0.0
    %893 = vmatpush2.msra.mxu0 0.0
    %894 = vmatprep.subr.mxu0 0.0
    %895 = vmatpush2.msra.mxu0 0.0
    %896 = vmatprep.subr.mxu0 0.0
    %897 = vmatpush2.msra.mxu0 0.0
    %898 = vmatprep.subr.mxu0 0.0
    %899 = vmatpush2.msra.mxu0 0.0
    %900 = vmatprep.subr.mxu0 0.0
    %901 = vmatpush2.msra.mxu0 0.0
    %902 = vmatprep.subr.mxu0 0.0
    %903 = vmatpush2.msra.mxu0 0.0
    %904 = vmatprep.subr.mxu0 0.0
    %905 = vmatpush2.msra.mxu0 0.0
    %906 = vmatprep.subr.mxu0 0.0
    %907 = vmatpush2.msra.mxu0 0.0
    %908 = vmatprep.subr.mxu0 0.0
    %909 = vmatpush2.msra.mxu0 0.0
    %910 = vmatprep.subr.mxu0 0.0
    %911 = vmatpush2.msra.mxu0 0.0
    %912 = vmatprep.subr.mxu0 0.0
    %913 = vmatpush2.msra.mxu0 0.0
    %914 = vmatprep.subr.mxu0 0.0
    %915 = vmatpush2.msra.mxu0 0.0
    %916 = vmatprep.subr.mxu0 0.0
    %917 = vmatpush2.msra.mxu0 0.0
    %918 = vmatprep.mubr.f32.mxu0 0.0
    %919 = vmatmul.mubr.f32.gmra.mxu0 %v852
    %v920 = vpop.f32.mrf.mxu0
    %v921 = vadd.f32 0.0, %v920
    %v922 = vpop.f32.mrf.mxu0
    %923 = vdwg.mxu0
    %v925 = vrot.slane %v921, 2
    %v927 = vadd.f32 %v286, %v925
    %v928 = vxor.u32 %v927, 2147483648
    %v929 = vmul.f32 %v928, 1.442695
    %v930 = vpow.pop %v929
    %v931 = vadd.f32 %v930, 1.0
    %v932 = vrcp.pop %v931
    %v933 = vmul.f32 1.0, %v932
    %v934 = vtanh.pop %v927
    %v936 = vrot.slane %v734, 6
    %v938 = vmul.f32 %v933, %v936
    %940 = vrot.lane.b32.xlu0 %v934, 64
    %v941 = vpop.permute.xlu0 %940
    %v943 = vmul.f32 %v933, %v941
    %945 = vrot.lane.b32.xlu0 %v943, 32
    %v946 = vpop.permute.xlu0 %945
    %v948 = vadd.f32 %v938, %v946
    %v949 = vtanh.pop %v948
    %951 = vrot.lane.b32.xlu0 %v949, 64
    %v952 = vpop.permute.xlu0 %951
    %v954 = vmul.f32 %v933, %v952
    %955 = vrot.lane.b32.xlu0 %v740, 32
    %v956 = vpop.permute.xlu0 %955
    %v959 = vrot.slane %v847, 4
    %960 = vrot.lane.b32.xlu0 %v959, 64
    %v961 = vpop.permute.xlu0 %960
    %v963 = vsel %vm212, %v956, %v961
    %v965 = vrot.slane %v963, 4
    %v966 = vsel %vm119, %v965, 0
    %968 = vmatprep.subr.mxu0 0.0
    %969 = vmatpush1.msra.mxu0 0.0
    %970 = vmatprep.subr.mxu0 0.0
    %971 = vmatpush1.msra.mxu0 0.0
    %972 = vmatprep.subr.mxu0 0.0
    %973 = vmatpush1.msra.mxu0 0.0
    %974 = vmatprep.subr.mxu0 0.0
    %975 = vmatpush1.msra.mxu0 0.0
    %976 = vmatprep.subr.mxu0 0.0
    %977 = vmatpush1.msra.mxu0 0.0
    %978 = vmatprep.subr.mxu0 0.0
    %979 = vmatpush1.msra.mxu0 0.0
    %980 = vmatprep.subr.mxu0 0.0
    %981 = vmatpush1.msra.mxu0 0.0
    %982 = vmatprep.subr.mxu0 0.0
    %983 = vmatpush1.msra.mxu0 0.0
    %984 = vmatprep.subr.mxu0 0.0
    %985 = vmatpush1.msra.mxu0 %v305
    %986 = vmatprep.subr.mxu0 0.0
    %987 = vmatpush1.msra.mxu0 %v304
    %988 = vmatprep.subr.mxu0 0.0
    %989 = vmatpush1.msra.mxu0 %v303
    %990 = vmatprep.subr.mxu0 0.0
    %991 = vmatpush1.msra.mxu0 %v302
    %992 = vmatprep.subr.mxu0 0.0
    %993 = vmatpush1.msra.mxu0 %v301
    %994 = vmatprep.subr.mxu0 0.0
    %995 = vmatpush1.msra.mxu0 %v300
    %996 = vmatprep.subr.mxu0 0.0
    %997 = vmatpush1.msra.mxu0 %v299
    %998 = vmatprep.subr.mxu0 0.0
    %999 = vmatpush1.msra.mxu0 %v298
    %1000 = vmatprep.subr.mxu0 0.0
    %1001 = vmatpush2.msra.mxu0 0.0
    %1002 = vmatprep.subr.mxu0 0.0
    %1003 = vmatpush2.msra.mxu0 0.0
    %1004 = vmatprep.subr.mxu0 0.0
    %1005 = vmatpush2.msra.mxu0 0.0
    %1006 = vmatprep.subr.mxu0 0.0
    %1007 = vmatpush2.msra.mxu0 0.0
    %1008 = vmatprep.subr.mxu0 0.0
    %1009 = vmatpush2.msra.mxu0 0.0
    %1010 = vmatprep.subr.mxu0 0.0
    %1011 = vmatpush2.msra.mxu0 0.0
    %1012 = vmatprep.subr.mxu0 0.0
    %1013 = vmatpush2.msra.mxu0 0.0
    %1014 = vmatprep.subr.mxu0 0.0
    %1015 = vmatpush2.msra.mxu0 0.0
    %1016 = vmatprep.subr.mxu0 0.0
    %1017 = vmatpush2.msra.mxu0 0.0
    %1018 = vmatprep.subr.mxu0 0.0
    %1019 = vmatpush2.msra.mxu0 0.0
    %1020 = vmatprep.subr.mxu0 0.0
    %1021 = vmatpush2.msra.mxu0 0.0
    %1022 = vmatprep.subr.mxu0 0.0
    %1023 = vmatpush2.msra.mxu0 0.0
    %1024 = vmatprep.subr.mxu0 0.0
    %1025 = vmatpush2.msra.mxu0 0.0
    %1026 = vmatprep.subr.mxu0 0.0
    %1027 = vmatpush2.msra.mxu0 0.0
    %1028 = vmatprep.subr.mxu0 0.0
    %1029 = vmatpush2.msra.mxu0 0.0
    %1030 = vmatprep.subr.mxu0 0.0
    %1031 = vmatpush2.msra.mxu0 0.0
    %1032 = vmatprep.mubr.f32.mxu0 0.0
    %1033 = vmatmul.mubr.f32.gmra.mxu0 %v966
    %v1034 = vpop.f32.mrf.mxu0
    %v1035 = vadd.f32 %v311, %v1034
    %v1036 = vpop.f32.mrf.mxu0
    %1037 = vdwg.mxu0
    %v1038 = vxor.u32 %v1035, 2147483648
    %v1039 = vmul.f32 %v1038, 1.442695
    %v1040 = vpow.pop %v1039
    %v1041 = vadd.f32 %v1040, 1.0
    %v1042 = vrcp.pop %v1041
    %v1043 = vmul.f32 1.0, %v1042
    %v1044 = vtanh.pop %v1035
    %v1045 = vmul.f32 %v1043, %v841
    %1047 = vrot.lane.b32.xlu0 %v1044, 64
    %v1048 = vpop.permute.xlu0 %1047
    %v1050 = vmul.f32 %v1043, %v1048
    %1052 = vrot.lane.b32.xlu0 %v1050, 32
    %v1053 = vpop.permute.xlu0 %1052
    %v1055 = vadd.f32 %v1045, %v1053
    %v1056 = vtanh.pop %v1055
    %1058 = vrot.lane.b32.xlu0 %v1056, 64
    %v1059 = vpop.permute.xlu0 %1058
    %v1061 = vmul.f32 %v1043, %v1059
    %v1063 = vrot.slane %v954, 6
    %1064 = vrot.lane.b32.xlu0 %v1063, 32
    %v1065 = vpop.permute.xlu0 %1064
    %v1066 = vsel %vm212, %v1065, 0
    %1068 = vmatprep.subr.mxu0 0.0
    %1069 = vmatpush1.msra.mxu0 0.0
    %1070 = vmatprep.subr.mxu0 0.0
    %1071 = vmatpush1.msra.mxu0 0.0
    %1072 = vmatprep.subr.mxu0 0.0
    %1073 = vmatpush1.msra.mxu0 0.0
    %1074 = vmatprep.subr.mxu0 0.0
    %1075 = vmatpush1.msra.mxu0 0.0
    %1076 = vmatprep.subr.mxu0 0.0
    %1077 = vmatpush1.msra.mxu0 0.0
    %1078 = vmatprep.subr.mxu0 0.0
    %1079 = vmatpush1.msra.mxu0 0.0
    %1080 = vmatprep.subr.mxu0 0.0
    %1081 = vmatpush1.msra.mxu0 0.0
    %1082 = vmatprep.subr.mxu0 0.0
    %1083 = vmatpush1.msra.mxu0 0.0
    %1084 = vmatprep.subr.mxu0 0.0
    %1085 = vmatpush1.msra.mxu0 0.0
    %1086 = vmatprep.subr.mxu0 0.0
    %1087 = vmatpush1.msra.mxu0 0.0
    %1088 = vmatprep.subr.mxu0 0.0
    %1089 = vmatpush1.msra.mxu0 0.0
    %1090 = vmatprep.subr.mxu0 0.0
    %1091 = vmatpush1.msra.mxu0 0.0
    %1092 = vmatprep.subr.mxu0 0.0
    %1093 = vmatpush1.msra.mxu0 %v297
    %1094 = vmatprep.subr.mxu0 0.0
    %1095 = vmatpush1.msra.mxu0 %v296
    %1096 = vmatprep.subr.mxu0 0.0
    %1097 = vmatpush1.msra.mxu0 %v295
    %1098 = vmatprep.subr.mxu0 0.0
    %1099 = vmatpush1.msra.mxu0 %v294
    %1100 = vmatprep.subr.mxu0 0.0
    %1101 = vmatpush2.msra.mxu0 0.0
    %1102 = vmatprep.subr.mxu0 0.0
    %1103 = vmatpush2.msra.mxu0 0.0
    %1104 = vmatprep.subr.mxu0 0.0
    %1105 = vmatpush2.msra.mxu0 0.0
    %1106 = vmatprep.subr.mxu0 0.0
    %1107 = vmatpush2.msra.mxu0 0.0
    %1108 = vmatprep.subr.mxu0 0.0
    %1109 = vmatpush2.msra.mxu0 0.0
    %1110 = vmatprep.subr.mxu0 0.0
    %1111 = vmatpush2.msra.mxu0 0.0
    %1112 = vmatprep.subr.mxu0 0.0
    %1113 = vmatpush2.msra.mxu0 0.0
    %1114 = vmatprep.subr.mxu0 0.0
    %1115 = vmatpush2.msra.mxu0 0.0
    %1116 = vmatprep.subr.mxu0 0.0
    %1117 = vmatpush2.msra.mxu0 0.0
    %1118 = vmatprep.subr.mxu0 0.0
    %1119 = vmatpush2.msra.mxu0 0.0
    %1120 = vmatprep.subr.mxu0 0.0
    %1121 = vmatpush2.msra.mxu0 0.0
    %1122 = vmatprep.subr.mxu0 0.0
    %1123 = vmatpush2.msra.mxu0 0.0
    %1124 = vmatprep.subr.mxu0 0.0
    %1125 = vmatpush2.msra.mxu0 0.0
    %1126 = vmatprep.subr.mxu0 0.0
    %1127 = vmatpush2.msra.mxu0 0.0
    %1128 = vmatprep.subr.mxu0 0.0
    %1129 = vmatpush2.msra.mxu0 0.0
    %1130 = vmatprep.subr.mxu0 0.0
    %1131 = vmatpush2.msra.mxu0 0.0
    %1132 = vmatprep.mubr.f32.mxu0 0.0
    %1133 = vmatmul.mubr.f32.gmra.mxu0 %v1066
    %v1134 = vpop.f32.mrf.mxu0
    %v1135 = vadd.f32 0.0, %v1134
    %v1136 = vpop.f32.mrf.mxu0
    %1137 = vdwg.mxu0
    %v1138 = vadd.f32 %v291, %v1135
    %v1139 = vxor.u32 %v1138, 2147483648
    %v1140 = vmul.f32 %v1139, 1.442695
    %v1141 = vpow.pop %v1140
    %v1142 = vadd.f32 %v1141, 1.0
    %v1143 = vrcp.pop %v1142
    %v1144 = vmul.f32 1.0, %v1143
    %v1145 = vtanh.pop %v1138
    %v1147 = vrot.slane %v948, 6
    %v1149 = vmul.f32 %v1144, %v1147
    %1151 = vrot.lane.b32.xlu0 %v1145, 64
    %v1152 = vpop.permute.xlu0 %1151
    %v1154 = vmul.f32 %v1144, %v1152
    %1156 = vrot.lane.b32.xlu0 %v1154, 32
    %v1157 = vpop.permute.xlu0 %1156
    %v1159 = vadd.f32 %v1149, %v1157
    %v1160 = vtanh.pop %v1159
    %1162 = vrot.lane.b32.xlu0 %v1160, 64
    %v1163 = vpop.permute.xlu0 %1162
    %v1165 = vmul.f32 %v1144, %v1163
    %1166 = vrot.lane.b32.xlu0 %v954, 32
    %v1167 = vpop.permute.xlu0 %1166
    %v1170 = vrot.slane %v1061, 2
    %1171 = vrot.lane.b32.xlu0 %v1170, 64
    %v1172 = vpop.permute.xlu0 %1171
    %v1174 = vsel %vm212, %v1167, %v1172
    %v1176 = vrot.slane %v1174, 6
    %v1177 = vsel %vm119, %v1176, 0
    %1179 = vmatprep.subr.mxu0 0.0
    %1180 = vmatpush1.msra.mxu0 0.0
    %1181 = vmatprep.subr.mxu0 0.0
    %1182 = vmatpush1.msra.mxu0 0.0
    %1183 = vmatprep.subr.mxu0 0.0
    %1184 = vmatpush1.msra.mxu0 0.0
    %1185 = vmatprep.subr.mxu0 0.0
    %1186 = vmatpush1.msra.mxu0 0.0
    %1187 = vmatprep.subr.mxu0 0.0
    %1188 = vmatpush1.msra.mxu0 0.0
    %1189 = vmatprep.subr.mxu0 0.0
    %1190 = vmatpush1.msra.mxu0 0.0
    %1191 = vmatprep.subr.mxu0 0.0
    %1192 = vmatpush1.msra.mxu0 0.0
    %1193 = vmatprep.subr.mxu0 0.0
    %1194 = vmatpush1.msra.mxu0 0.0
    %1195 = vmatprep.subr.mxu0 0.0
    %1196 = vmatpush1.msra.mxu0 %v305
    %1197 = vmatprep.subr.mxu0 0.0
    %1198 = vmatpush1.msra.mxu0 %v304
    %1199 = vmatprep.subr.mxu0 0.0
    %1200 = vmatpush1.msra.mxu0 %v303
    %1201 = vmatprep.subr.mxu0 0.0
    %1202 = vmatpush1.msra.mxu0 %v302
    %1203 = vmatprep.subr.mxu0 0.0
    %1204 = vmatpush1.msra.mxu0 %v301
    %1205 = vmatprep.subr.mxu0 0.0
    %1206 = vmatpush1.msra.mxu0 %v300
    %1207 = vmatprep.subr.mxu0 0.0
    %1208 = vmatpush1.msra.mxu0 %v299
    %1209 = vmatprep.subr.mxu0 0.0
    %1210 = vmatpush1.msra.mxu0 %v298
    %1211 = vmatprep.subr.mxu0 0.0
    %1212 = vmatpush2.msra.mxu0 0.0
    %1213 = vmatprep.subr.mxu0 0.0
    %1214 = vmatpush2.msra.mxu0 0.0
    %1215 = vmatprep.subr.mxu0 0.0
    %1216 = vmatpush2.msra.mxu0 0.0
    %1217 = vmatprep.subr.mxu0 0.0
    %1218 = vmatpush2.msra.mxu0 0.0
    %1219 = vmatprep.subr.mxu0 0.0
    %1220 = vmatpush2.msra.mxu0 0.0
    %1221 = vmatprep.subr.mxu0 0.0
    %1222 = vmatpush2.msra.mxu0 0.0
    %1223 = vmatprep.subr.mxu0 0.0
    %1224 = vmatpush2.msra.mxu0 0.0
    %1225 = vmatprep.subr.mxu0 0.0
    %1226 = vmatpush2.msra.mxu0 0.0
    %1227 = vmatprep.subr.mxu0 0.0
    %1228 = vmatpush2.msra.mxu0 0.0
    %1229 = vmatprep.subr.mxu0 0.0
    %1230 = vmatpush2.msra.mxu0 0.0
    %1231 = vmatprep.subr.mxu0 0.0
    %1232 = vmatpush2.msra.mxu0 0.0
    %1233 = vmatprep.subr.mxu0 0.0
    %1234 = vmatpush2.msra.mxu0 0.0
    %1235 = vmatprep.subr.mxu0 0.0
    %1236 = vmatpush2.msra.mxu0 0.0
    %1237 = vmatprep.subr.mxu0 0.0
    %1238 = vmatpush2.msra.mxu0 0.0
    %1239 = vmatprep.subr.mxu0 0.0
    %1240 = vmatpush2.msra.mxu0 0.0
    %1241 = vmatprep.subr.mxu0 0.0
    %1242 = vmatpush2.msra.mxu0 0.0
    %1243 = vmatprep.mubr.f32.mxu0 0.0
    %1244 = vmatmul.mubr.f32.gmra.mxu0 %v1177
    %v1245 = vpop.f32.mrf.mxu0
    %v1246 = vadd.f32 %v311, %v1245
    %v1247 = vpop.f32.mrf.mxu0
    %1248 = vdwg.mxu0
    %v1249 = vxor.u32 %v1246, 2147483648
    %v1250 = vmul.f32 %v1249, 1.442695
    %v1251 = vpow.pop %v1250
    %v1252 = vadd.f32 %v1251, 1.0
    %v1253 = vrcp.pop %v1252
    %v1254 = vmul.f32 1.0, %v1253
    %v1255 = vtanh.pop %v1246
    %v1256 = vmul.f32 %v1254, %v1055
    %1258 = vrot.lane.b32.xlu0 %v1255, 64
    %v1259 = vpop.permute.xlu0 %1258
    %v1261 = vmul.f32 %v1254, %v1259
    %1263 = vrot.lane.b32.xlu0 %v1261, 32
    %v1264 = vpop.permute.xlu0 %1263
    %v1266 = vadd.f32 %v1256, %v1264
    %v1267 = vtanh.pop %v1266
    %1269 = vrot.lane.b32.xlu0 %v1267, 64
    %v1270 = vpop.permute.xlu0 %1269
    %v1272 = vmul.f32 %v1254, %v1270
    %1274 = vrot.lane.b32.xlu0 %v1165, 32
    %v1275 = vpop.permute.xlu0 %1274
    %v1276 = vsel %vm212, %v1275, 0
    %1278 = vmatprep.subr.mxu0 0.0
    %1279 = vmatpush1.msra.mxu0 0.0
    %1280 = vmatprep.subr.mxu0 0.0
    %1281 = vmatpush1.msra.mxu0 0.0
    %1282 = vmatprep.subr.mxu0 0.0
    %1283 = vmatpush1.msra.mxu0 0.0
    %1284 = vmatprep.subr.mxu0 0.0
    %1285 = vmatpush1.msra.mxu0 0.0
    %1286 = vmatprep.subr.mxu0 0.0
    %1287 = vmatpush1.msra.mxu0 0.0
    %1288 = vmatprep.subr.mxu0 0.0
    %1289 = vmatpush1.msra.mxu0 0.0
    %1290 = vmatprep.subr.mxu0 0.0
    %1291 = vmatpush1.msra.mxu0 0.0
    %1292 = vmatprep.subr.mxu0 0.0
    %1293 = vmatpush1.msra.mxu0 0.0
    %1294 = vmatprep.subr.mxu0 0.0
    %1295 = vmatpush1.msra.mxu0 0.0
    %1296 = vmatprep.subr.mxu0 0.0
    %1297 = vmatpush1.msra.mxu0 0.0
    %1298 = vmatprep.subr.mxu0 0.0
    %1299 = vmatpush1.msra.mxu0 0.0
    %1300 = vmatprep.subr.mxu0 0.0
    %1301 = vmatpush1.msra.mxu0 0.0
    %1302 = vmatprep.subr.mxu0 0.0
    %1303 = vmatpush1.msra.mxu0 %v297
    %1304 = vmatprep.subr.mxu0 0.0
    %1305 = vmatpush1.msra.mxu0 %v296
    %1306 = vmatprep.subr.mxu0 0.0
    %1307 = vmatpush1.msra.mxu0 %v295
    %1308 = vmatprep.subr.mxu0 0.0
    %1309 = vmatpush1.msra.mxu0 %v294
    %1310 = vmatprep.subr.mxu0 0.0
    %1311 = vmatpush2.msra.mxu0 0.0
    %1312 = vmatprep.subr.mxu0 0.0
    %1313 = vmatpush2.msra.mxu0 0.0
    %1314 = vmatprep.subr.mxu0 0.0
    %1315 = vmatpush2.msra.mxu0 0.0
    %1316 = vmatprep.subr.mxu0 0.0
    %1317 = vmatpush2.msra.mxu0 0.0
    %1318 = vmatprep.subr.mxu0 0.0
    %1319 = vmatpush2.msra.mxu0 0.0
    %1320 = vmatprep.subr.mxu0 0.0
    %1321 = vmatpush2.msra.mxu0 0.0
    %1322 = vmatprep.subr.mxu0 0.0
    %1323 = vmatpush2.msra.mxu0 0.0
    %1324 = vmatprep.subr.mxu0 0.0
    %1325 = vmatpush2.msra.mxu0 0.0
    %1326 = vmatprep.subr.mxu0 0.0
    %1327 = vmatpush2.msra.mxu0 0.0
    %1328 = vmatprep.subr.mxu0 0.0
    %1329 = vmatpush2.msra.mxu0 0.0
    %1330 = vmatprep.subr.mxu0 0.0
    %1331 = vmatpush2.msra.mxu0 0.0
    %1332 = vmatprep.subr.mxu0 0.0
    %1333 = vmatpush2.msra.mxu0 0.0
    %1334 = vmatprep.subr.mxu0 0.0
    %1335 = vmatpush2.msra.mxu0 0.0
    %1336 = vmatprep.subr.mxu0 0.0
    %1337 = vmatpush2.msra.mxu0 0.0
    %1338 = vmatprep.subr.mxu0 0.0
    %1339 = vmatpush2.msra.mxu0 0.0
    %1340 = vmatprep.subr.mxu0 0.0
    %1341 = vmatpush2.msra.mxu0 0.0
    %1342 = vmatprep.mubr.f32.mxu0 0.0
    %1343 = vmatmul.mubr.f32.gmra.mxu0 %v1276
    %v1344 = vpop.f32.mrf.mxu0
    %v1345 = vadd.f32 0.0, %v1344
    %v1346 = vpop.f32.mrf.mxu0
    %1347 = vdwg.mxu0
    %v1349 = vrot.slane %v1345, 6
    %v1351 = vadd.f32 %v291, %v1349
    %v1352 = vxor.u32 %v1351, 2147483648
    %v1353 = vmul.f32 %v1352, 1.442695
    %v1354 = vpow.pop %v1353
    %v1355 = vadd.f32 %v1354, 1.0
    %v1356 = vrcp.pop %v1355
    %v1357 = vmul.f32 1.0, %v1356
    %v1358 = vtanh.pop %v1351
    %v1360 = vrot.slane %v1159, 6
    %v1362 = vmul.f32 %v1357, %v1360
    %1364 = vrot.lane.b32.xlu0 %v1358, 64
    %v1365 = vpop.permute.xlu0 %1364
    %v1367 = vmul.f32 %v1357, %v1365
    %1369 = vrot.lane.b32.xlu0 %v1367, 32
    %v1370 = vpop.permute.xlu0 %1369
    %v1372 = vadd.f32 %v1362, %v1370
    %v1373 = vtanh.pop %v1372
    %1375 = vrot.lane.b32.xlu0 %v1373, 64
    %v1376 = vpop.permute.xlu0 %1375
    %v1378 = vmul.f32 %v1357, %v1376
    %1381 = vrot.lane.b32.xlu0 %v1272, 64
    %v1382 = vpop.permute.xlu0 %1381
    %v1384 = vsel %vm212, %v1275, %v1382
    %v1386 = vsel %vm119, %v1384, 0
    %1388 = vmatprep.subr.mxu0 0.0
    %1389 = vmatpush1.msra.mxu0 0.0
    %1390 = vmatprep.subr.mxu0 0.0
    %1391 = vmatpush1.msra.mxu0 0.0
    %1392 = vmatprep.subr.mxu0 0.0
    %1393 = vmatpush1.msra.mxu0 0.0
    %1394 = vmatprep.subr.mxu0 0.0
    %1395 = vmatpush1.msra.mxu0 0.0
    %1396 = vmatprep.subr.mxu0 0.0
    %1397 = vmatpush1.msra.mxu0 0.0
    %1398 = vmatprep.subr.mxu0 0.0
    %1399 = vmatpush1.msra.mxu0 0.0
    %1400 = vmatprep.subr.mxu0 0.0
    %1401 = vmatpush1.msra.mxu0 0.0
    %1402 = vmatprep.subr.mxu0 0.0
    %1403 = vmatpush1.msra.mxu0 0.0
    %1404 = vmatprep.subr.mxu0 0.0
    %1405 = vmatpush1.msra.mxu0 %v305
    %1406 = vmatprep.subr.mxu0 0.0
    %1407 = vmatpush1.msra.mxu0 %v304
    %1408 = vmatprep.subr.mxu0 0.0
    %1409 = vmatpush1.msra.mxu0 %v303
    %1410 = vmatprep.subr.mxu0 0.0
    %1411 = vmatpush1.msra.mxu0 %v302
    %1412 = vmatprep.subr.mxu0 0.0
    %1413 = vmatpush1.msra.mxu0 %v301
    %1414 = vmatprep.subr.mxu0 0.0
    %1415 = vmatpush1.msra.mxu0 %v300
    %1416 = vmatprep.subr.mxu0 0.0
    %1417 = vmatpush1.msra.mxu0 %v299
    %1418 = vmatprep.subr.mxu0 0.0
    %1419 = vmatpush1.msra.mxu0 %v298
    %1420 = vmatprep.subr.mxu0 0.0
    %1421 = vmatpush2.msra.mxu0 0.0
    %1422 = vmatprep.subr.mxu0 0.0
    %1423 = vmatpush2.msra.mxu0 0.0
    %1424 = vmatprep.subr.mxu0 0.0
    %1425 = vmatpush2.msra.mxu0 0.0
    %1426 = vmatprep.subr.mxu0 0.0
    %1427 = vmatpush2.msra.mxu0 0.0
    %1428 = vmatprep.subr.mxu0 0.0
    %1429 = vmatpush2.msra.mxu0 0.0
    %1430 = vmatprep.subr.mxu0 0.0
    %1431 = vmatpush2.msra.mxu0 0.0
    %1432 = vmatprep.subr.mxu0 0.0
    %1433 = vmatpush2.msra.mxu0 0.0
    %1434 = vmatprep.subr.mxu0 0.0
    %1435 = vmatpush2.msra.mxu0 0.0
    %1436 = vmatprep.subr.mxu0 0.0
    %1437 = vmatpush2.msra.mxu0 0.0
    %1438 = vmatprep.subr.mxu0 0.0
    %1439 = vmatpush2.msra.mxu0 0.0
    %1440 = vmatprep.subr.mxu0 0.0
    %1441 = vmatpush2.msra.mxu0 0.0
    %1442 = vmatprep.subr.mxu0 0.0
    %1443 = vmatpush2.msra.mxu0 0.0
    %1444 = vmatprep.subr.mxu0 0.0
    %1445 = vmatpush2.msra.mxu0 0.0
    %1446 = vmatprep.subr.mxu0 0.0
    %1447 = vmatpush2.msra.mxu0 0.0
    %1448 = vmatprep.subr.mxu0 0.0
    %1449 = vmatpush2.msra.mxu0 0.0
    %1450 = vmatprep.subr.mxu0 0.0
    %1451 = vmatpush2.msra.mxu0 0.0
    %1452 = vmatprep.mubr.f32.mxu0 0.0
    %1453 = vmatmul.mubr.f32.gmra.mxu0 %v1386
    %v1454 = vpop.f32.mrf.mxu0
    %v1455 = vadd.f32 %v311, %v1454
    %v1456 = vpop.f32.mrf.mxu0
    %1457 = vdwg.mxu0
    %v1458 = vxor.u32 %v1455, 2147483648
    %v1459 = vmul.f32 %v1458, 1.442695
    %v1460 = vpow.pop %v1459
    %v1461 = vadd.f32 %v1460, 1.0
    %v1462 = vrcp.pop %v1461
    %v1463 = vmul.f32 1.0, %v1462
    %v1464 = vtanh.pop %v1455
    %v1465 = vmul.f32 %v1463, %v1266
    %1467 = vrot.lane.b32.xlu0 %v1464, 64
    %v1468 = vpop.permute.xlu0 %1467
    %v1470 = vmul.f32 %v1463, %v1468
    %1472 = vrot.lane.b32.xlu0 %v1470, 32
    %v1473 = vpop.permute.xlu0 %1472
    %v1475 = vadd.f32 %v1465, %v1473
    %v1476 = vtanh.pop %v1475
    %1478 = vrot.lane.b32.xlu0 %v1476, 64
    %v1479 = vpop.permute.xlu0 %1478
    %v1481 = vmul.f32 %v1463, %v1479
    %v1483 = vrot.slane %v1378, 2
    %1484 = vrot.lane.b32.xlu0 %v1483, 32
    %v1485 = vpop.permute.xlu0 %1484
    %v1486 = vsel %vm212, %v1485, 0
    %1488 = vmatprep.subr.mxu0 0.0
    %1489 = vmatpush1.msra.mxu0 0.0
    %1490 = vmatprep.subr.mxu0 0.0
    %1491 = vmatpush1.msra.mxu0 0.0
    %1492 = vmatprep.subr.mxu0 0.0
    %1493 = vmatpush1.msra.mxu0 0.0
    %1494 = vmatprep.subr.mxu0 0.0
    %1495 = vmatpush1.msra.mxu0 0.0
    %1496 = vmatprep.subr.mxu0 0.0
    %1497 = vmatpush1.msra.mxu0 0.0
    %1498 = vmatprep.subr.mxu0 0.0
    %1499 = vmatpush1.msra.mxu0 0.0
    %1500 = vmatprep.subr.mxu0 0.0
    %1501 = vmatpush1.msra.mxu0 0.0
    %1502 = vmatprep.subr.mxu0 0.0
    %1503 = vmatpush1.msra.mxu0 0.0
    %1504 = vmatprep.subr.mxu0 0.0
    %1505 = vmatpush1.msra.mxu0 0.0
    %1506 = vmatprep.subr.mxu0 0.0
    %1507 = vmatpush1.msra.mxu0 0.0
    %1508 = vmatprep.subr.mxu0 0.0
    %1509 = vmatpush1.msra.mxu0 0.0
    %1510 = vmatprep.subr.mxu0 0.0
    %1511 = vmatpush1.msra.mxu0 0.0
    %1512 = vmatprep.subr.mxu0 0.0
    %1513 = vmatpush1.msra.mxu0 %v297
    %1514 = vmatprep.subr.mxu0 0.0
    %1515 = vmatpush1.msra.mxu0 %v296
    %1516 = vmatprep.subr.mxu0 0.0
    %1517 = vmatpush1.msra.mxu0 %v295
    %1518 = vmatprep.subr.mxu0 0.0
    %1519 = vmatpush1.msra.mxu0 %v294
    %1520 = vmatprep.subr.mxu0 0.0
    %1521 = vmatpush2.msra.mxu0 0.0
    %1522 = vmatprep.subr.mxu0 0.0
    %1523 = vmatpush2.msra.mxu0 0.0
    %1524 = vmatprep.subr.mxu0 0.0
    %1525 = vmatpush2.msra.mxu0 0.0
    %1526 = vmatprep.subr.mxu0 0.0
    %1527 = vmatpush2.msra.mxu0 0.0
    %1528 = vmatprep.subr.mxu0 0.0
    %1529 = vmatpush2.msra.mxu0 0.0
    %1530 = vmatprep.subr.mxu0 0.0
    %1531 = vmatpush2.msra.mxu0 0.0
    %1532 = vmatprep.subr.mxu0 0.0
    %1533 = vmatpush2.msra.mxu0 0.0
    %1534 = vmatprep.subr.mxu0 0.0
    %1535 = vmatpush2.msra.mxu0 0.0
    %1536 = vmatprep.subr.mxu0 0.0
    %1537 = vmatpush2.msra.mxu0 0.0
    %1538 = vmatprep.subr.mxu0 0.0
    %1539 = vmatpush2.msra.mxu0 0.0
    %1540 = vmatprep.subr.mxu0 0.0
    %1541 = vmatpush2.msra.mxu0 0.0
    %1542 = vmatprep.subr.mxu0 0.0
    %1543 = vmatpush2.msra.mxu0 0.0
    %1544 = vmatprep.subr.mxu0 0.0
    %1545 = vmatpush2.msra.mxu0 0.0
    %1546 = vmatprep.subr.mxu0 0.0
    %1547 = vmatpush2.msra.mxu0 0.0
    %1548 = vmatprep.subr.mxu0 0.0
    %1549 = vmatpush2.msra.mxu0 0.0
    %1550 = vmatprep.subr.mxu0 0.0
    %1551 = vmatpush2.msra.mxu0 0.0
    %1552 = vmatprep.mubr.f32.mxu0 0.0
    %1553 = vmatmul.mubr.f32.gmra.mxu0 %v1486
    %v1554 = vpop.f32.mrf.mxu0
    %v1555 = vadd.f32 0.0, %v1554
    %v1556 = vpop.f32.mrf.mxu0
    %1557 = vdwg.mxu0
    %v1559 = vrot.slane %v1555, 4
    %v1561 = vadd.f32 %v291, %v1559
    %v1562 = vxor.u32 %v1561, 2147483648
    %v1563 = vmul.f32 %v1562, 1.442695
    %v1564 = vpow.pop %v1563
    %v1565 = vadd.f32 %v1564, 1.0
    %v1566 = vrcp.pop %v1565
    %v1567 = vmul.f32 1.0, %v1566
    %v1568 = vtanh.pop %v1561
    %v1570 = vrot.slane %v1372, 6
    %v1572 = vmul.f32 %v1567, %v1570
    %1574 = vrot.lane.b32.xlu0 %v1568, 64
    %v1575 = vpop.permute.xlu0 %1574
    %v1577 = vmul.f32 %v1567, %v1575
    %1579 = vrot.lane.b32.xlu0 %v1577, 32
    %v1580 = vpop.permute.xlu0 %1579
    %v1582 = vadd.f32 %v1572, %v1580
    %v1583 = vtanh.pop %v1582
    %1585 = vrot.lane.b32.xlu0 %v1583, 64
    %v1586 = vpop.permute.xlu0 %1585
    %v1588 = vmul.f32 %v1567, %v1586
    %1589 = vrot.lane.b32.xlu0 %v1378, 32
    %v1590 = vpop.permute.xlu0 %1589
    %v1593 = vrot.slane %v1481, 6
    %1594 = vrot.lane.b32.xlu0 %v1593, 64
    %v1595 = vpop.permute.xlu0 %1594
    %v1597 = vsel %vm212, %v1590, %v1595
    %v1599 = vrot.slane %v1597, 2
    %v1600 = vsel %vm119, %v1599, 0
    %1602 = vmatprep.subr.mxu0 0.0
    %1603 = vmatpush1.msra.mxu0 0.0
    %1604 = vmatprep.subr.mxu0 0.0
    %1605 = vmatpush1.msra.mxu0 0.0
    %1606 = vmatprep.subr.mxu0 0.0
    %1607 = vmatpush1.msra.mxu0 0.0
    %1608 = vmatprep.subr.mxu0 0.0
    %1609 = vmatpush1.msra.mxu0 0.0
    %1610 = vmatprep.subr.mxu0 0.0
    %1611 = vmatpush1.msra.mxu0 0.0
    %1612 = vmatprep.subr.mxu0 0.0
    %1613 = vmatpush1.msra.mxu0 0.0
    %1614 = vmatprep.subr.mxu0 0.0
    %1615 = vmatpush1.msra.mxu0 0.0
    %1616 = vmatprep.subr.mxu0 0.0
    %1617 = vmatpush1.msra.mxu0 0.0
    %1618 = vmatprep.subr.mxu0 0.0
    %1619 = vmatpush1.msra.mxu0 %v305
    %1620 = vmatprep.subr.mxu0 0.0
    %1621 = vmatpush1.msra.mxu0 %v304
    %1622 = vmatprep.subr.mxu0 0.0
    %1623 = vmatpush1.msra.mxu0 %v303
    %1624 = vmatprep.subr.mxu0 0.0
    %1625 = vmatpush1.msra.mxu0 %v302
    %1626 = vmatprep.subr.mxu0 0.0
    %1627 = vmatpush1.msra.mxu0 %v301
    %1628 = vmatprep.subr.mxu0 0.0
    %1629 = vmatpush1.msra.mxu0 %v300
    %1630 = vmatprep.subr.mxu0 0.0
    %1631 = vmatpush1.msra.mxu0 %v299
    %1632 = vmatprep.subr.mxu0 0.0
    %1633 = vmatpush1.msra.mxu0 %v298
    %1634 = vmatprep.subr.mxu0 0.0
    %1635 = vmatpush2.msra.mxu0 0.0
    %1636 = vmatprep.subr.mxu0 0.0
    %1637 = vmatpush2.msra.mxu0 0.0
    %1638 = vmatprep.subr.mxu0 0.0
    %1639 = vmatpush2.msra.mxu0 0.0
    %1640 = vmatprep.subr.mxu0 0.0
    %1641 = vmatpush2.msra.mxu0 0.0
    %1642 = vmatprep.subr.mxu0 0.0
    %1643 = vmatpush2.msra.mxu0 0.0
    %1644 = vmatprep.subr.mxu0 0.0
    %1645 = vmatpush2.msra.mxu0 0.0
    %1646 = vmatprep.subr.mxu0 0.0
    %1647 = vmatpush2.msra.mxu0 0.0
    %1648 = vmatprep.subr.mxu0 0.0
    %1649 = vmatpush2.msra.mxu0 0.0
    %1650 = vmatprep.subr.mxu0 0.0
    %1651 = vmatpush2.msra.mxu0 0.0
    %1652 = vmatprep.subr.mxu0 0.0
    %1653 = vmatpush2.msra.mxu0 0.0
    %1654 = vmatprep.subr.mxu0 0.0
    %1655 = vmatpush2.msra.mxu0 0.0
    %1656 = vmatprep.subr.mxu0 0.0
    %1657 = vmatpush2.msra.mxu0 0.0
    %1658 = vmatprep.subr.mxu0 0.0
    %1659 = vmatpush2.msra.mxu0 0.0
    %1660 = vmatprep.subr.mxu0 0.0
    %1661 = vmatpush2.msra.mxu0 0.0
    %1662 = vmatprep.subr.mxu0 0.0
    %1663 = vmatpush2.msra.mxu0 0.0
    %1664 = vmatprep.subr.mxu0 0.0
    %1665 = vmatpush2.msra.mxu0 0.0
    %1666 = vmatprep.mubr.f32.mxu0 0.0
    %1667 = vmatmul.mubr.f32.gmra.mxu0 %v1600
    %v1668 = vpop.f32.mrf.mxu0
    %v1669 = vadd.f32 %v311, %v1668
    %v1670 = vpop.f32.mrf.mxu0
    %1671 = vdwg.mxu0
    %v1672 = vxor.u32 %v1669, 2147483648
    %v1673 = vmul.f32 %v1672, 1.442695
    %v1674 = vpow.pop %v1673
    %v1675 = vadd.f32 %v1674, 1.0
    %v1676 = vrcp.pop %v1675
    %v1677 = vmul.f32 1.0, %v1676
    %v1678 = vtanh.pop %v1669
    %v1679 = vmul.f32 %v1677, %v1475
    %1681 = vrot.lane.b32.xlu0 %v1678, 64
    %v1682 = vpop.permute.xlu0 %1681
    %v1684 = vmul.f32 %v1677, %v1682
    %1686 = vrot.lane.b32.xlu0 %v1684, 32
    %v1687 = vpop.permute.xlu0 %1686
    %v1689 = vadd.f32 %v1679, %v1687
    %v1690 = vtanh.pop %v1689
    %1692 = vrot.lane.b32.xlu0 %v1690, 64
    %v1693 = vpop.permute.xlu0 %1692
    %v1695 = vmul.f32 %v1677, %v1693
    %v1697 = vrot.slane %v1588, 4
    %1698 = vrot.lane.b32.xlu0 %v1697, 32
    %v1699 = vpop.permute.xlu0 %1698
    %v1700 = vsel %vm212, %v1699, 0
    %1702 = vmatprep.subr.mxu0 0.0
    %1703 = vmatpush1.msra.mxu0 0.0
    %1704 = vmatprep.subr.mxu0 0.0
    %1705 = vmatpush1.msra.mxu0 0.0
    %1706 = vmatprep.subr.mxu0 0.0
    %1707 = vmatpush1.msra.mxu0 0.0
    %1708 = vmatprep.subr.mxu0 0.0
    %1709 = vmatpush1.msra.mxu0 0.0
    %1710 = vmatprep.subr.mxu0 0.0
    %1711 = vmatpush1.msra.mxu0 0.0
    %1712 = vmatprep.subr.mxu0 0.0
    %1713 = vmatpush1.msra.mxu0 0.0
    %1714 = vmatprep.subr.mxu0 0.0
    %1715 = vmatpush1.msra.mxu0 0.0
    %1716 = vmatprep.subr.mxu0 0.0
    %1717 = vmatpush1.msra.mxu0 0.0
    %1718 = vmatprep.subr.mxu0 0.0
    %1719 = vmatpush1.msra.mxu0 0.0
    %1720 = vmatprep.subr.mxu0 0.0
    %1721 = vmatpush1.msra.mxu0 0.0
    %1722 = vmatprep.subr.mxu0 0.0
    %1723 = vmatpush1.msra.mxu0 0.0
    %1724 = vmatprep.subr.mxu0 0.0
    %1725 = vmatpush1.msra.mxu0 0.0
    %1726 = vmatprep.subr.mxu0 0.0
    %1727 = vmatpush1.msra.mxu0 %v297
    %1728 = vmatprep.subr.mxu0 0.0
    %1729 = vmatpush1.msra.mxu0 %v296
    %1730 = vmatprep.subr.mxu0 0.0
    %1731 = vmatpush1.msra.mxu0 %v295
    %1732 = vmatprep.subr.mxu0 0.0
    %1733 = vmatpush1.msra.mxu0 %v294
    %1734 = vmatprep.subr.mxu0 0.0
    %1735 = vmatpush2.msra.mxu0 0.0
    %1736 = vmatprep.subr.mxu0 0.0
    %1737 = vmatpush2.msra.mxu0 0.0
    %1738 = vmatprep.subr.mxu0 0.0
    %1739 = vmatpush2.msra.mxu0 0.0
    %1740 = vmatprep.subr.mxu0 0.0
    %1741 = vmatpush2.msra.mxu0 0.0
    %1742 = vmatprep.subr.mxu0 0.0
    %1743 = vmatpush2.msra.mxu0 0.0
    %1744 = vmatprep.subr.mxu0 0.0
    %1745 = vmatpush2.msra.mxu0 0.0
    %1746 = vmatprep.subr.mxu0 0.0
    %1747 = vmatpush2.msra.mxu0 0.0
    %1748 = vmatprep.subr.mxu0 0.0
    %1749 = vmatpush2.msra.mxu0 0.0
    %1750 = vmatprep.subr.mxu0 0.0
    %1751 = vmatpush2.msra.mxu0 0.0
    %1752 = vmatprep.subr.mxu0 0.0
    %1753 = vmatpush2.msra.mxu0 0.0
    %1754 = vmatprep.subr.mxu0 0.0
    %1755 = vmatpush2.msra.mxu0 0.0
    %1756 = vmatprep.subr.mxu0 0.0
    %1757 = vmatpush2.msra.mxu0 0.0
    %1758 = vmatprep.subr.mxu0 0.0
    %1759 = vmatpush2.msra.mxu0 0.0
    %1760 = vmatprep.subr.mxu0 0.0
    %1761 = vmatpush2.msra.mxu0 0.0
    %1762 = vmatprep.subr.mxu0 0.0
    %1763 = vmatpush2.msra.mxu0 0.0
    %1764 = vmatprep.subr.mxu0 0.0
    %1765 = vmatpush2.msra.mxu0 0.0
    %1766 = vmatprep.mubr.f32.mxu0 0.0
    %1767 = vmatmul.mubr.f32.gmra.mxu0 %v1700
    %v1768 = vpop.f32.mrf.mxu0
    %v1769 = vadd.f32 0.0, %v1768
    %v1770 = vpop.f32.mrf.mxu0
    %1771 = vdwg.mxu0
    %v1773 = vrot.slane %v1769, 2
    %v1775 = vadd.f32 %v291, %v1773
    %v1776 = vxor.u32 %v1775, 2147483648
    %v1777 = vmul.f32 %v1776, 1.442695
    %v1778 = vpow.pop %v1777
    %v1779 = vadd.f32 %v1778, 1.0
    %v1780 = vrcp.pop %v1779
    %v1781 = vmul.f32 1.0, %v1780
    %v1782 = vtanh.pop %v1775
    %v1784 = vrot.slane %v1582, 6
    %v1786 = vmul.f32 %v1781, %v1784
    %1788 = vrot.lane.b32.xlu0 %v1782, 64
    %v1789 = vpop.permute.xlu0 %1788
    %v1791 = vmul.f32 %v1781, %v1789
    %1793 = vrot.lane.b32.xlu0 %v1791, 32
    %v1794 = vpop.permute.xlu0 %1793
    %v1796 = vadd.f32 %v1786, %v1794
    %v1797 = vtanh.pop %v1796
    %1799 = vrot.lane.b32.xlu0 %v1797, 64
    %v1800 = vpop.permute.xlu0 %1799
    %v1802 = vmul.f32 %v1781, %v1800
    %1803 = vrot.lane.b32.xlu0 %v1588, 32
    %v1804 = vpop.permute.xlu0 %1803
    %v1807 = vrot.slane %v1695, 4
    %1808 = vrot.lane.b32.xlu0 %v1807, 64
    %v1809 = vpop.permute.xlu0 %1808
    %v1811 = vsel %vm212, %v1804, %v1809
    %v1813 = vrot.slane %v1811, 4
    %v1814 = vsel %vm119, %v1813, 0
    %1816 = vmatprep.subr.mxu0 0.0
    %1817 = vmatpush1.msra.mxu0 0.0
    %1818 = vmatprep.subr.mxu0 0.0
    %1819 = vmatpush1.msra.mxu0 0.0
    %1820 = vmatprep.subr.mxu0 0.0
    %1821 = vmatpush1.msra.mxu0 0.0
    %1822 = vmatprep.subr.mxu0 0.0
    %1823 = vmatpush1.msra.mxu0 0.0
    %1824 = vmatprep.subr.mxu0 0.0
    %1825 = vmatpush1.msra.mxu0 0.0
    %1826 = vmatprep.subr.mxu0 0.0
    %1827 = vmatpush1.msra.mxu0 0.0
    %1828 = vmatprep.subr.mxu0 0.0
    %1829 = vmatpush1.msra.mxu0 0.0
    %1830 = vmatprep.subr.mxu0 0.0
    %1831 = vmatpush1.msra.mxu0 0.0
    %1832 = vmatprep.subr.mxu0 0.0
    %1833 = vmatpush1.msra.mxu0 %v305
    %1834 = vmatprep.subr.mxu0 0.0
    %1835 = vmatpush1.msra.mxu0 %v304
    %1836 = vmatprep.subr.mxu0 0.0
    %1837 = vmatpush1.msra.mxu0 %v303
    %1838 = vmatprep.subr.mxu0 0.0
    %1839 = vmatpush1.msra.mxu0 %v302
    %1840 = vmatprep.subr.mxu0 0.0
    %1841 = vmatpush1.msra.mxu0 %v301
    %1842 = vmatprep.subr.mxu0 0.0
    %1843 = vmatpush1.msra.mxu0 %v300
    %1844 = vmatprep.subr.mxu0 0.0
    %1845 = vmatpush1.msra.mxu0 %v299
    %1846 = vmatprep.subr.mxu0 0.0
    %1847 = vmatpush1.msra.mxu0 %v298
    %1848 = vmatprep.subr.mxu0 0.0
    %1849 = vmatpush2.msra.mxu0 0.0
    %1850 = vmatprep.subr.mxu0 0.0
    %1851 = vmatpush2.msra.mxu0 0.0
    %1852 = vmatprep.subr.mxu0 0.0
    %1853 = vmatpush2.msra.mxu0 0.0
    %1854 = vmatprep.subr.mxu0 0.0
    %1855 = vmatpush2.msra.mxu0 0.0
    %1856 = vmatprep.subr.mxu0 0.0
    %1857 = vmatpush2.msra.mxu0 0.0
    %1858 = vmatprep.subr.mxu0 0.0
    %1859 = vmatpush2.msra.mxu0 0.0
    %1860 = vmatprep.subr.mxu0 0.0
    %1861 = vmatpush2.msra.mxu0 0.0
    %1862 = vmatprep.subr.mxu0 0.0
    %1863 = vmatpush2.msra.mxu0 0.0
    %1864 = vmatprep.subr.mxu0 0.0
    %1865 = vmatpush2.msra.mxu0 0.0
    %1866 = vmatprep.subr.mxu0 0.0
    %1867 = vmatpush2.msra.mxu0 0.0
    %1868 = vmatprep.subr.mxu0 0.0
    %1869 = vmatpush2.msra.mxu0 0.0
    %1870 = vmatprep.subr.mxu0 0.0
    %1871 = vmatpush2.msra.mxu0 0.0
    %1872 = vmatprep.subr.mxu0 0.0
    %1873 = vmatpush2.msra.mxu0 0.0
    %1874 = vmatprep.subr.mxu0 0.0
    %1875 = vmatpush2.msra.mxu0 0.0
    %1876 = vmatprep.subr.mxu0 0.0
    %1877 = vmatpush2.msra.mxu0 0.0
    %1878 = vmatprep.subr.mxu0 0.0
    %1879 = vmatpush2.msra.mxu0 0.0
    %1880 = vmatprep.mubr.f32.mxu0 0.0
    %1881 = vmatmul.mubr.f32.gmra.mxu0 %v1814
    %v1882 = vpop.f32.mrf.mxu0
    %v1883 = vadd.f32 %v311, %v1882
    %v1884 = vpop.f32.mrf.mxu0
    %1885 = vdwg.mxu0
    %v1886 = vxor.u32 %v1883, 2147483648
    %v1887 = vmul.f32 %v1886, 1.442695
    %v1888 = vpow.pop %v1887
    %v1889 = vadd.f32 %v1888, 1.0
    %v1890 = vrcp.pop %v1889
    %v1891 = vmul.f32 1.0, %v1890
    %v1892 = vtanh.pop %v1883
    %v1893 = vmul.f32 %v1891, %v1689
    %1895 = vrot.lane.b32.xlu0 %v1892, 64
    %v1896 = vpop.permute.xlu0 %1895
    %v1898 = vmul.f32 %v1891, %v1896
    %1900 = vrot.lane.b32.xlu0 %v1898, 32
    %v1901 = vpop.permute.xlu0 %1900
    %v1903 = vadd.f32 %v1893, %v1901
    %v1904 = vtanh.pop %v1903
    %1906 = vrot.lane.b32.xlu0 %v1904, 64
    %v1907 = vpop.permute.xlu0 %1906
    %v1909 = vmul.f32 %v1891, %v1907
    %1911 = vrot.lane.b32.xlu0 %v1802, 32
    %v1912 = vpop.permute.xlu0 %1911
    %v1915 = vrot.slane %v1909, 2
    %1916 = vrot.lane.b32.xlu0 %v1915, 64
    %v1917 = vpop.permute.xlu0 %1916
    %v1919 = vsel %vm212, %v1912, %v1917
    %v1921 = vrot.slane %v1919, 6
    %v1922 = vsel %vm119, %v1921, 0
    %1924 = vmatprep.subr.mxu0 0.0
    %1925 = vmatpush1.msra.mxu0 0.0
    %1926 = vmatprep.subr.mxu0 0.0
    %1927 = vmatpush1.msra.mxu0 0.0
    %1928 = vmatprep.subr.mxu0 0.0
    %1929 = vmatpush1.msra.mxu0 0.0
    %1930 = vmatprep.subr.mxu0 0.0
    %1931 = vmatpush1.msra.mxu0 0.0
    %1932 = vmatprep.subr.mxu0 0.0
    %1933 = vmatpush1.msra.mxu0 0.0
    %1934 = vmatprep.subr.mxu0 0.0
    %1935 = vmatpush1.msra.mxu0 0.0
    %1936 = vmatprep.subr.mxu0 0.0
    %1937 = vmatpush1.msra.mxu0 0.0
    %1938 = vmatprep.subr.mxu0 0.0
    %1939 = vmatpush1.msra.mxu0 0.0
    %1940 = vmatprep.subr.mxu0 0.0
    %1941 = vmatpush1.msra.mxu0 %v305
    %1942 = vmatprep.subr.mxu0 0.0
    %1943 = vmatpush1.msra.mxu0 %v304
    %1944 = vmatprep.subr.mxu0 0.0
    %1945 = vmatpush1.msra.mxu0 %v303
    %1946 = vmatprep.subr.mxu0 0.0
    %1947 = vmatpush1.msra.mxu0 %v302
    %1948 = vmatprep.subr.mxu0 0.0
    %1949 = vmatpush1.msra.mxu0 %v301
    %1950 = vmatprep.subr.mxu0 0.0
    %1951 = vmatpush1.msra.mxu0 %v300
    %1952 = vmatprep.subr.mxu0 0.0
    %1953 = vmatpush1.msra.mxu0 %v299
    %1954 = vmatprep.subr.mxu0 0.0
    %1955 = vmatpush1.msra.mxu0 %v298
    %1956 = vmatprep.subr.mxu0 0.0
    %1957 = vmatpush2.msra.mxu0 0.0
    %1958 = vmatprep.subr.mxu0 0.0
    %1959 = vmatpush2.msra.mxu0 0.0
    %1960 = vmatprep.subr.mxu0 0.0
    %1961 = vmatpush2.msra.mxu0 0.0
    %1962 = vmatprep.subr.mxu0 0.0
    %1963 = vmatpush2.msra.mxu0 0.0
    %1964 = vmatprep.subr.mxu0 0.0
    %1965 = vmatpush2.msra.mxu0 0.0
    %1966 = vmatprep.subr.mxu0 0.0
    %1967 = vmatpush2.msra.mxu0 0.0
    %1968 = vmatprep.subr.mxu0 0.0
    %1969 = vmatpush2.msra.mxu0 0.0
    %1970 = vmatprep.subr.mxu0 0.0
    %1971 = vmatpush2.msra.mxu0 0.0
    %1972 = vmatprep.subr.mxu0 0.0
    %1973 = vmatpush2.msra.mxu0 0.0
    %1974 = vmatprep.subr.mxu0 0.0
    %1975 = vmatpush2.msra.mxu0 0.0
    %1976 = vmatprep.subr.mxu0 0.0
    %1977 = vmatpush2.msra.mxu0 0.0
    %1978 = vmatprep.subr.mxu0 0.0
    %1979 = vmatpush2.msra.mxu0 0.0
    %1980 = vmatprep.subr.mxu0 0.0
    %1981 = vmatpush2.msra.mxu0 0.0
    %1982 = vmatprep.subr.mxu0 0.0
    %1983 = vmatpush2.msra.mxu0 0.0
    %1984 = vmatprep.subr.mxu0 0.0
    %1985 = vmatpush2.msra.mxu0 0.0
    %1986 = vmatprep.subr.mxu0 0.0
    %1987 = vmatpush2.msra.mxu0 0.0
    %1988 = vmatprep.mubr.f32.mxu0 0.0
    %1989 = vmatmul.mubr.f32.gmra.mxu0 %v1922
    %v1990 = vpop.f32.mrf.mxu0
    %v1991 = vadd.f32 %v311, %v1990
    %v1992 = vpop.f32.mrf.mxu0
    %1993 = vdwg.mxu0
    %v1994 = vxor.u32 %v1991, 2147483648
    %v1995 = vmul.f32 %v1994, 1.442695
    %v1996 = vpow.pop %v1995
    %v1997 = vadd.f32 %v1996, 1.0
    %v1998 = vrcp.pop %v1997
    %v1999 = vmul.f32 1.0, %v1998
    %v2000 = vtanh.pop %v1991
    %v2001 = vmul.f32 %v1999, %v1903
    %2003 = vrot.lane.b32.xlu0 %v2000, 64
    %v2004 = vpop.permute.xlu0 %2003
    %v2006 = vmul.f32 %v1999, %v2004
    %2008 = vrot.lane.b32.xlu0 %v2006, 32
    %v2009 = vpop.permute.xlu0 %2008
    %v2011 = vadd.f32 %v2001, %v2009
    %v2012 = vtanh.pop %v2011
    %2014 = vrot.lane.b32.xlu0 %v2012, 64
    %v2015 = vpop.permute.xlu0 %2014
    %v2017 = vmul.f32 %v1999, %v2015
    %v2018 = vrot.slane %v847, 6
    %v2020 = vrot.slane %v1061, 4
    %v2022 = vrot.slane %v1272, 2
    %v2024 = vrot.slane %v1695, 6
    %v2026 = vrot.slane %v1909, 4
    %v2029 = vrot.slane %v2017, 2
    %vm2031 = vcmask 1041408
    %v2032 = vsel %vm2031, %v633, %v2018
    %vm2033 = vcmask 1043456
    %v2034 = vsel %vm2033, %v2032, %v2020
    %vm2035 = vcmask 1045504
    %v2036 = vsel %vm2035, %v2034, %v2022
    %v2037 = vsel %vm2031, %v1481, %v2024
    %v2038 = vsel %vm2033, %v2037, %v2026
    %v2039 = vsel %vm2035, %v2038, %v2029
    %v2040 = vld [vmem:[%s9] sm:$0xff]
    %v2041 = vld [vmem:[%s9 + $0x8] sm:$0xff]
    %v2042 = vld [vmem:[%s9 + $0x10] sm:$0xff]
    %v2043 = vld [vmem:[%s9 + $0x18] sm:$0xff]
    %v2044 = vld [vmem:[%s10] sm:$0x1]
    %v2046 = vlaneseq
    %v2047 = vshrl.u32 %v2046, 7
    %v2048 = vsub.s32 0, %v2047
    %v2049 = vrot.slane %v2044, %v2048
    %2053 = vrot.lane.b32.xlu0 %v2036, 32
    %v2054 = vpop.permute.xlu0 %2053
    %2055 = vrot.lane.b32.xlu0 %v2039, 32
    %v2056 = vpop.permute.xlu0 %2055
    %v2057 = vsel %vm212, %v2054, 0
    %v2059 = vsel %vm212, %v2056, 0
    %2061 = vmatprep.subr.mxu0 0.0
    %2062 = vmatpush1.msra.mxu0 0.0
    %2063 = vmatprep.subr.mxu0 0.0
    %2064 = vmatpush1.msra.mxu0 0.0
    %2065 = vmatprep.subr.mxu0 0.0
    %2066 = vmatpush1.msra.mxu0 0.0
    %2067 = vmatprep.subr.mxu0 0.0
    %2068 = vmatpush1.msra.mxu0 0.0
    %2069 = vmatprep.subr.mxu0 0.0
    %2070 = vmatpush1.msra.mxu0 0.0
    %2071 = vmatprep.subr.mxu0 0.0
    %2072 = vmatpush1.msra.mxu0 0.0
    %2073 = vmatprep.subr.mxu0 0.0
    %2074 = vmatpush1.msra.mxu0 0.0
    %2075 = vmatprep.subr.mxu0 0.0
    %2076 = vmatpush1.msra.mxu0 0.0
    %2077 = vmatprep.subr.mxu0 0.0
    %2078 = vmatpush1.msra.mxu0 0.0
    %2079 = vmatprep.subr.mxu0 0.0
    %2080 = vmatpush1.msra.mxu0 0.0
    %2081 = vmatprep.subr.mxu0 0.0
    %2082 = vmatpush1.msra.mxu0 0.0
    %2083 = vmatprep.subr.mxu0 0.0
    %2084 = vmatpush1.msra.mxu0 0.0
    %2085 = vmatprep.subr.mxu0 0.0
    %2086 = vmatpush1.msra.mxu0 %v2043
    %2087 = vmatprep.subr.mxu0 0.0
    %2088 = vmatpush1.msra.mxu0 %v2042
    %2089 = vmatprep.subr.mxu0 0.0
    %2090 = vmatpush1.msra.mxu0 %v2041
    %2091 = vmatprep.subr.mxu0 0.0
    %2092 = vmatpush1.msra.mxu0 %v2040
    %2093 = vmatprep.subr.mxu0 0.0
    %2094 = vmatpush2.msra.mxu0 0.0
    %2095 = vmatprep.subr.mxu0 0.0
    %2096 = vmatpush2.msra.mxu0 0.0
    %2097 = vmatprep.subr.mxu0 0.0
    %2098 = vmatpush2.msra.mxu0 0.0
    %2099 = vmatprep.subr.mxu0 0.0
    %2100 = vmatpush2.msra.mxu0 0.0
    %2101 = vmatprep.subr.mxu0 0.0
    %2102 = vmatpush2.msra.mxu0 0.0
    %2103 = vmatprep.subr.mxu0 0.0
    %2104 = vmatpush2.msra.mxu0 0.0
    %2105 = vmatprep.subr.mxu0 0.0
    %2106 = vmatpush2.msra.mxu0 0.0
    %2107 = vmatprep.subr.mxu0 0.0
    %2108 = vmatpush2.msra.mxu0 0.0
    %2109 = vmatprep.subr.mxu0 0.0
    %2110 = vmatpush2.msra.mxu0 0.0
    %2111 = vmatprep.subr.mxu0 0.0
    %2112 = vmatpush2.msra.mxu0 0.0
    %2113 = vmatprep.subr.mxu0 0.0
    %2114 = vmatpush2.msra.mxu0 0.0
    %2115 = vmatprep.subr.mxu0 0.0
    %2116 = vmatpush2.msra.mxu0 0.0
    %2117 = vmatprep.subr.mxu0 0.0
    %2118 = vmatpush2.msra.mxu0 0.0
    %2119 = vmatprep.subr.mxu0 0.0
    %2120 = vmatpush2.msra.mxu0 0.0
    %2121 = vmatprep.subr.mxu0 0.0
    %2122 = vmatpush2.msra.mxu0 0.0
    %2123 = vmatprep.subr.mxu0 0.0
    %2124 = vmatpush2.msra.mxu0 0.0
    %2125 = vmatprep.mubr.f32.mxu0 0.0
    %2126 = vmatmul.mubr.f32.gmra.mxu0 %v2057
    %v2127 = vpop.f32.mrf.mxu0
    %v2128 = vadd.f32 %v2049, %v2127
    %v2129 = vpop.f32.mrf.mxu0
    %2130 = vmatprep.mubr.f32.mxu0 0.0
    %2131 = vmatmul.mubr.f32.gmra.mxu0 %v2059
    %v2132 = vpop.f32.mrf.mxu0
    %v2133 = vadd.f32 %v2049, %v2132
    %v2134 = vpop.f32.mrf.mxu0
    %2135 = vdwg.mxu0
    %2136 = vst [vmem:[#allocation10] sm:$0xff] %v2128
    %2137 = vst [vmem:[#allocation10 + $0x8] sm:$0xff] %v2133
    %v2138 = vsel %vm212, %v1912, %v1796
    %vm2139 = vcmask 523270
    %2140 = vst.msk [vmem:[#allocation11 - $0x6] sm:$0xc0] %vm2139, %v2138
    %2141 = vrot.lane.b32.xlu0 %v2017, 32
    %v2142 = vpop.permute.xlu0 %2141
    %v2144 = vsel %vm212, %v2142, %v2011
    %s2145 = scalar_lea.vmem [#allocation11], 2
    %vm2146 = vcmask 517120
    %2147 = vst.msk [vmem:[%s2145] sm:$0x3] %vm2146, %v2144
    // Predicated region
    $region62: #{tpu_custom_call.1} parent=1 // pred_check
      _
    $region63: #{tpu_custom_call.1} parent=1 // pred_check_branch
      %2149 = sbr.rel (0) target = $region65
    $region64: #{tpu_custom_call.1} parent=1 // pred_region
      %s2151 = ssub.s32 256, 256
      %2152 = vsyncadd [#allocation4], %s2151
      %s2153 = sshll.u32 [#allocation10], 4
      %s2154 = int_to_ptr.vmem [resolvable:$true] %s2153
      %2159 = dma.vmem_to_hbm [thread:$0]  %s2154, 256, %s11, [#allocation4], 128, 128, 8
    $region65: #{tpu_custom_call.1} parent=1 // pred_fallthru
      _
    // Predicated region
    $region66: #{tpu_custom_call.1} parent=1 // pred_check
      _
    $region67: #{tpu_custom_call.1} parent=1 // pred_check_branch
      %2161 = sbr.rel (0) target = $region69
    $region68: #{tpu_custom_call.1} parent=1 // pred_region
      %s2163 = ssub.s32 64, 64
      %2164 = vsyncadd [#allocation12], %s2163
      %s2165 = sshll.u32 [#allocation11], 4
      %s2166 = int_to_ptr.vmem [resolvable:$true] %s2165
      %2171 = dma.vmem_to_hbm [thread:$0]  %s2166, 64, %s12, [#allocation12], 32, 32, 2
    $region69: #{tpu_custom_call.1} parent=1 // pred_fallthru
      _
    // Predicated region
    $region70: #{tpu_custom_call.1} parent=1 // pred_check
      _
    $region71: #{tpu_custom_call.1} parent=1 // pred_check_branch
      %2173 = sbr.rel (0) target = $region73
    $region72: #{tpu_custom_call.1} parent=1 // pred_region
      %2174 = dma.done [#allocation4], 256
    $region73: #{tpu_custom_call.1} parent=1 // pred_fallthru
      _
    // Predicated region
    $region74: #{tpu_custom_call.1} parent=1 // pred_check
      _
    $region75: #{tpu_custom_call.1} parent=1 // pred_check_branch
      %2176 = sbr.rel (0) target = $region77
    $region76: #{tpu_custom_call.1} parent=1 // pred_region
      %2177 = dma.done [#allocation12], 64
    $region77: #{tpu_custom_call.1} parent=1 // pred_fallthru
      _
    %2178 = vsyncpa [#allocation3], 1
    %2179 = vsyncpa [#allocation6], 1
    %2180 = vsyncpa [#allocation9], 1
    %2181 = vsyncpa [#allocation4], 1
    %2182 = vsyncpa [#allocation12], 1

</llo_original>
